<compile_context>
chip_gen: v6e
topology: v6e:2x2x1
jax: 0.10.0
libtpu: 0.0.40
codegen_flags: <defaults>
</compile_context>

<pallas_src>
import jax
import jax.numpy as jnp
from jax import lax
from jax.experimental import pallas as pl
from jax.experimental.pallas import tpu as pltpu

BN_EPS = 1e-5
_VMEM_LIMIT = 48 * 1024 * 1024     # safe scoped-VMEM budget on v5e/v6e/v7x


def _round_up(a, b):
    return (a + b - 1) // b * b


def _spec(block_shape, index_map, *, single_buffer=False):
    """BlockSpec helper; grid-invariant blocks request single buffering."""
    if single_buffer and hasattr(pl, "Buffered"):
        try:
            return pl.BlockSpec(block_shape, index_map, pipeline_mode=pl.Buffered(1))
        except TypeError:          # older BlockSpec without pipeline_mode kwarg
            pass
    return pl.BlockSpec(block_shape, index_map)


def _make_conv_stats_kernel(kh, kw, wp, wo, mp, tm):
    """Pass 1: fused im2col + GEMM + per-tile BN partial sums (one M tile)."""

    def kernel(w_ref, x_ref, xo_ref, h_ref, sum_ref, ssq_ref):
        # w_ref : (KH*KW, 2Cp, Cin) bf16, VMEM resident (single-buffered)
        # x_ref : (1, Cin, TM)      bf16, current flat tile of the padded input
        # xo_ref: (1, Cin, OV)      bf16, head of the next tile (tap overhang)
        xcat = jnp.concatenate([x_ref[0], xo_ref[0]], axis=1)      # (Cin, TM+OV)
        c2p = w_ref.shape[1]
        acc = jnp.zeros((c2p, tm), jnp.float32)
        # KH*KW shifted matmuls accumulated on the MXU in f32 (fused im2col):
        # tap (i, j) is a static lane shift of d = i*Wp + j in the flat layout.
        for i in range(kh):
            for j in range(kw):
                d = i * wp + j                                      # static offset
                acc = acc + jnp.dot(w_ref[i * kw + j], xcat[:, d:d + tm],
                                    preferred_element_type=jnp.float32)
        # Big intermediate goes back to HBM in bf16 (halves h_T traffic).
        h_ref[0] = acc.astype(h_ref.dtype)
        # BN partials over valid columns only (row overhang + tail pad masked).
        m = pl.program_id(1)
        col = m * tm + lax.broadcasted_iota(jnp.int32, (1, tm), 1)
        valid = (col < mp) & ((col % wp) < wo)
        hv = jnp.where(valid, acc, 0.0)
        sum_ref[0, 0] = jnp.sum(hv, axis=1, keepdims=True)
        ssq_ref[0, 0] = jnp.sum(hv * hv, axis=1, keepdims=True)

    return kernel


def _bn_glu_kernel(h_ref, scale_ref, shift_ref, o_ref):
    """Pass 2: y = h*scale + shift (folded BN), then GLU lin * sigmoid(gate)."""
    hn = h_ref[0].astype(jnp.float32) * scale_ref[...] + shift_ref[...]
    coutp = o_ref.shape[1]                      # multiple of 8 -> aligned split
    o_ref[0] = hn[:coutp, :] * jax.nn.sigmoid(hn[coutp:, :])


def gated_deconv2d(x, weight, bias=None, *, stride=1, padding=0,
                   gamma=None, beta=None, tm=512, eps=BN_EPS):
    """Forward of GatedDeconv2D (batch_norm=True, training-mode batch stats).

    x:      (N, Cin, H, W)            NCHW
    weight: (Cin, 2*Cout, KH, KW)     PyTorch ConvTranspose2d layout
    bias:   (2*Cout,) accepted for API parity; training-mode BN subtracts the
            batch mean, so a constant per-channel bias cancels exactly.
    """
    del bias  # exactly cancelled by training-mode BN (beta handled separately)

    n, cin, h, w = x.shape
    wcin, c2, kh, kw = weight.shape
    assert wcin == cin and c2 % 2 == 0
    cout = c2 // 2
    assert padding <= kh - 1 and padding <= kw - 1, "padding > k-1 unsupported"

    ho = (h - 1) * stride - 2 * padding + kh
    wo = (w - 1) * stride - 2 * padding + kw

    # ConvTranspose2d == stride-1 conv on a zero-dilated, (K-1-p)-padded input
    # with a spatially flipped, channel-swapped weight (output_padding=0).
    # TODO(synk): stride>1 should use sub-pixel phase decomposition instead of
    #             zero-dilation (stride^2 x less GEMM work + smaller stream).
    if stride > 1:
        hd, wd = (h - 1) * stride + 1, (w - 1) * stride + 1
        xdil = jnp.zeros((n, cin, hd, wd), x.dtype).at[:, :, ::stride, ::stride].set(x)
    else:
        xdil = x
    ph, pw = kh - 1 - padding, kw - 1 - padding
    xp = jnp.pad(xdil, ((0, 0), (0, 0), (ph, ph), (pw, pw))).astype(jnp.bfloat16)
    hp_, wp_ = int(xp.shape[2]), int(xp.shape[3])
    assert hp_ == ho + kh - 1 and wp_ == wo + kw - 1

    # Channel halves padded to a multiple of 8 so the GLU split is sublane
    # aligned; padded (all-zero) channels are dropped at the end.
    coutp = _round_up(cout, 8)
    c2p = 2 * coutp

    # weight -> per-tap (2Cp, Cin) matrices for the fused stride-1 conv.
    w_conv = jnp.transpose(jnp.flip(weight, axis=(2, 3)), (1, 0, 2, 3))  # (2C,Cin,KH,KW)
    w_taps = jnp.transpose(w_conv, (2, 3, 0, 1)).reshape(kh * kw, c2, cin)
    w_taps_p = jnp.zeros((kh * kw, c2p, cin), jnp.float32)
    w_taps_p = w_taps_p.at[:, :cout].set(w_taps[:, :cout].astype(jnp.float32))
    w_taps_p = w_taps_p.at[:, coutp:coutp + cout].set(w_taps[:, cout:].astype(jnp.float32))
    w_bf = w_taps_p.astype(jnp.bfloat16)

    g = jnp.ones((c2,), jnp.float32) if gamma is None else gamma.reshape(c2).astype(jnp.float32)
    b = jnp.zeros((c2,), jnp.float32) if beta is None else beta.reshape(c2).astype(jnp.float32)
    g_p = jnp.ones((c2p,), jnp.float32).at[:cout].set(g[:cout]).at[coutp:coutp + cout].set(g[cout:])
    b_p = jnp.zeros((c2p,), jnp.float32).at[:cout].set(b[:cout]).at[coutp:coutp + cout].set(b[cout:])

    # Flat "width-overhang" layout: per batch, output position p = ho*Wp + wo
    # with wo in [0, Wp); columns wo >= Wo are garbage (masked out of BN stats
    # and cropped at the end), which makes every tap a pure lane shift.
    mp = ho * wp_                               # per-batch flat output length
    dmax = (kh - 1) * wp_ + (kw - 1)            # largest tap shift
    ov = _round_up(max(dmax, 1), 128)           # lane-aligned overlap window
    tm_eff = min(_round_up(tm, 128), _round_up(mp, 128))
    tm_eff = _round_up(max(tm_eff, ov), ov)     # overlap index map needs ov | TM
    assert dmax <= tm_eff, "tap footprint exceeds tile; raise tm"
    mb_pad = _round_up(mp, tm_eff)
    grid_m = mb_pad // tm_eff
    ov_per_tile = tm_eff // ov

    l_flat = mb_pad + tm_eff                    # divisible by both TM and OV
    xf = xp.reshape(n, cin, hp_ * wp_)
    xf = jnp.pad(xf, ((0, 0), (0, 0), (0, l_flat - hp_ * wp_)))

    cparams = pltpu.CompilerParams(dimension_semantics=("parallel", "parallel"),
                                   vmem_limit_bytes=_VMEM_LIMIT)

    # ---------------- pass 1: fused deconv GEMM + per-tile BN partials --------
    h_t, psum, pssq = pl.pallas_call(
        _make_conv_stats_kernel(kh, kw, wp_, wo, mp, tm_eff),
        out_shape=(
            jax.ShapeDtypeStruct((n, c2p, mb_pad), jnp.bfloat16),
            jax.ShapeDtypeStruct((n, grid_m, c2p, 1), jnp.float32),
            jax.ShapeDtypeStruct((n, grid_m, c2p, 1), jnp.float32),
        ),
        grid_spec=pltpu.PrefetchScalarGridSpec(
            num_scalar_prefetch=0,
            grid=(n, grid_m),
            in_specs=[
                _spec((kh * kw, c2p, cin), lambda bi, mi: (0, 0, 0), single_buffer=True),
                pl.BlockSpec((1, cin, tm_eff), lambda bi, mi: (bi, 0, mi)),
                pl.BlockSpec((1, cin, ov),
                             lambda bi, mi: (bi, 0, (mi + 1) * ov_per_tile)),
            ],
            out_specs=(
                pl.BlockSpec((1, c2p, tm_eff), lambda bi, mi: (bi, 0, mi)),
                pl.BlockSpec((1, 1, c2p, 1), lambda bi, mi: (bi, mi, 0, 0)),
                pl.BlockSpec((1, 1, c2p, 1), lambda bi, mi: (bi, mi, 0, 0)),
            ),
        ),
        compiler_params=cparams,
    )(w_bf, xf, xf)

    # ---------------- tiny stat combine + BN scale/shift folding --------------
    count = jnp.float32(n * ho * wo)            # garbage / pad columns excluded
    mean = jnp.sum(psum, axis=(0, 1)) / count                       # (2Cp, 1)
    # TODO(synk): E[x^2]-mean^2 in f32 can cancel when |mean| >> std; a Chan-
    #             style centered combine would be more robust for huge N*Ho*Wo.
    var = jnp.maximum(jnp.sum(pssq, axis=(0, 1)) / count - mean * mean, 0.0)
    inv_std = lax.rsqrt(var + eps)
    scale = g_p.reshape(c2p, 1) * inv_std
    shift = b_p.reshape(c2p, 1) - mean * scale

    # ---------------- pass 2: folded BN + GLU gate -----------------------------
    out_p = pl.pallas_call(
        _bn_glu_kernel,
        out_shape=jax.ShapeDtypeStruct((n, coutp, mb_pad), jnp.float32),
        grid_spec=pltpu.PrefetchScalarGridSpec(
            num_scalar_prefetch=0,
            grid=(n, grid_m),
            in_specs=[
                pl.BlockSpec((1, c2p, tm_eff), lambda bi, mi: (bi, 0, mi)),
                _spec((c2p, 1), lambda bi, mi: (0, 0), single_buffer=True),
                _spec((c2p, 1), lambda bi, mi: (0, 0), single_buffer=True),
            ],
            out_specs=pl.BlockSpec((1, coutp, tm_eff), lambda bi, mi: (bi, 0, mi)),
        ),
        compiler_params=cparams,
    )(h_t, scale, shift)

    # Drop channel padding, width overhang and tile padding.  The per-batch
    # grid already emits (N, C, flat) order, so no N<->C transpose is needed.
    return out_p[:, :cout, :mp].reshape(n, cout, ho, wp_)[:, :, :, :wo]


def _reference(x, weight, bias, stride, padding, eps=BN_EPS, gemm_dtype=None):
    """Independent scatter-add ConvTranspose2d + training BN + GLU reference."""
    n, cin, h, w = x.shape
    _, c2, kh, kw = weight.shape
    if gemm_dtype is not None:        # mirror the kernel's bf16-rounded operands
        xr = x.astype(gemm_dtype).astype(jnp.float32)
        wr = weight.astype(gemm_dtype).astype(jnp.float32)
    else:
        xr, wr = x, weight
    hf = (h - 1) * stride + kh
    wf = (w - 1) * stride + kw
    canvas = jnp.zeros((n, c2, hf, wf), jnp.float32)
    for i in range(kh):
        for j in range(kw):
            tap = jnp.einsum('nchw,co->nohw', xr, wr[:, :, i, j],
                             precision=lax.Precision.HIGHEST)
            canvas = canvas.at[:, :, i:i + stride * (h - 1) + 1:stride,
                                      j:j + stride * (w - 1) + 1:stride].add(tap)
    ho = (h - 1) * stride - 2 * padding + kh
    wo = (w - 1) * stride - 2 * padding + kw
    out = canvas[:, :, padding:padding + ho, padding:padding + wo]
    out = out + bias[None, :, None, None]
    mean = jnp.mean(out, axis=(0, 2, 3), keepdims=True)
    var = jnp.mean((out - mean) ** 2, axis=(0, 2, 3), keepdims=True)
    hn = (out - mean) * lax.rsqrt(var + eps)
    c = c2 // 2
    return hn[:, :c] * jax.nn.sigmoid(hn[:, c:])


if __name__ == "__main__":
    key = jax.random.PRNGKey(0)
    k_x, k_w = jax.random.split(key)

    # GatedDeconv2D(input_ch=4, output_ch=4, kernel_size=3, stride=1, padding=1)
    N, CIN, H, W = 2, 4, 16, 16
    COUT, KH, KW = 4, 3, 3
    STRIDE, PADDING = 1, 1

    x = jax.random.normal(k_x, (N, CIN, H, W), dtype=jnp.float32)
    # nn.ConvTranspose2d weight layout (Cin, 2*Cout, KH, KW); init.normal_ / zeros_
    weight = jax.random.normal(k_w, (CIN, 2 * COUT, KH, KW), dtype=jnp.float32)
    bias = jnp.zeros((2 * COUT,), dtype=jnp.float32)

    out = gated_deconv2d(x, weight, bias, stride=STRIDE, padding=PADDING)
    out = jax.block_until_ready(out)

    HO = (H - 1) * STRIDE - 2 * PADDING + KH
    WO = (W - 1) * STRIDE - 2 * PADDING + KW
    assert out.shape == (N, COUT, HO, WO), out.shape

    # Check vs a reference whose conv uses the same bf16-rounded operands
    # (tolerance accounts for the bf16 h_T round-trip).
    ref_bf16 = _reference(x, weight, bias, STRIDE, PADDING, gemm_dtype=jnp.bfloat16)
    assert jnp.allclose(out, ref_bf16, rtol=1e-2, atol=1e-2), \
        float(jnp.max(jnp.abs(out - ref_bf16)))

    # Loose sanity check vs the full-f32 module semantics.
    ref_f32 = _reference(x, weight, bias, STRIDE, PADDING)
    assert jnp.allclose(out, ref_f32, rtol=5e-2, atol=5e-2), \
        float(jnp.max(jnp.abs(out - ref_f32)))

    print("KERNEL_OK")
</pallas_src>

<mosaic_0001>
module attributes {stable_mosaic.version = 11 : i64} {
  func.func @kernel(%arg0: i32, %arg1: i32, %arg2: memref<9x16x4xbf16, #tpu.memory_space<vmem>>, %arg3: memref<1x4x384xbf16, #tpu.memory_space<vmem>>, %arg4: memref<1x4x128xbf16, #tpu.memory_space<vmem>>, %arg5: memref<1x16x384xbf16, #tpu.memory_space<vmem>>, %arg6: memref<1x1x16x1xf32, #tpu.memory_space<vmem>>, %arg7: memref<1x1x16x1xf32, #tpu.memory_space<vmem>>) attributes {dimension_semantics = [#tpu.dimension_semantics<parallel>, #tpu.dimension_semantics<parallel>], iteration_bounds = array<i64: 2, 1>, scalar_prefetch = 0 : i64, scratch_operands = 0 : i64, tpu.core_type = #tpu.core_type<tc>, window_params = [{pipeline_mode = #tpu.pipeline_mode<synchronous>, transform_indices = @transform_0, window_bounds = array<i64: 9, 16, 4>}, {transform_indices = @transform_1, window_bounds = array<i64: 1, 4, 384>}, {transform_indices = @transform_2, window_bounds = array<i64: 1, 4, 128>}, {transform_indices = @transform_3, window_bounds = array<i64: 1, 16, 384>}, {transform_indices = @transform_4, window_bounds = array<i64: 1, 1, 16, 1>}, {transform_indices = @transform_5, window_bounds = array<i64: 1, 1, 16, 1>}]} {
    %c0 = arith.constant 0 : index
    %c0_0 = arith.constant 0 : index
    %c0_1 = arith.constant 0 : index
    %0 = vector.load %arg3[%c0, %c0_0, %c0_1] : memref<1x4x384xbf16, #tpu.memory_space<vmem>>, vector<1x4x384xbf16>
    %1 = vector.shape_cast %0 : vector<1x4x384xbf16> to vector<4x384xbf16>
    %c0_2 = arith.constant 0 : index
    %c0_3 = arith.constant 0 : index
    %c0_4 = arith.constant 0 : index
    %2 = vector.load %arg4[%c0_2, %c0_3, %c0_4] : memref<1x4x128xbf16, #tpu.memory_space<vmem>>, vector<1x4x128xbf16>
    %3 = vector.shape_cast %2 : vector<1x4x128xbf16> to vector<4x128xbf16>
    %4 = tpu.concatenate %1, %3 in 1 : vector<4x384xbf16>, vector<4x128xbf16> -> vector<4x512xbf16>
    %cst = arith.constant 0.000000e+00 : f32
    %5 = vector.broadcast %cst : f32 to vector<16x384xf32>
    %c0_5 = arith.constant 0 : index
    %c0_6 = arith.constant 0 : index
    %c0_7 = arith.constant 0 : index
    %6 = vector.load %arg2[%c0_5, %c0_6, %c0_7] : memref<9x16x4xbf16, #tpu.memory_space<vmem>>, vector<1x16x4xbf16>
    %7 = vector.shape_cast %6 : vector<1x16x4xbf16> to vector<16x4xbf16>
    %8 = vector.extract_strided_slice %4 {offsets = [0, 0], sizes = [4, 384], strides = [1, 1]} : vector<4x512xbf16> to vector<4x384xbf16>
    %cst_8 = arith.constant dense<0.000000e+00> : vector<16x384xf32>
    %9 = tpu.matmul %7, %8, %cst_8 {dimension_numbers = #tpu.dot_dimension_numbers<[1], [0], [0], [1], [0, 0, 1, 1], [], []>} : vector<16x4xbf16>, vector<4x384xbf16>, vector<16x384xf32> -> vector<16x384xf32>
    %10 = arith.addf %5, %9 : vector<16x384xf32>
    %c1 = arith.constant 1 : index
    %c0_9 = arith.constant 0 : index
    %c0_10 = arith.constant 0 : index
    %11 = vector.load %arg2[%c1, %c0_9, %c0_10] : memref<9x16x4xbf16, #tpu.memory_space<vmem>>, vector<1x16x4xbf16>
    %12 = vector.shape_cast %11 : vector<1x16x4xbf16> to vector<16x4xbf16>
    %13 = vector.extract_strided_slice %4 {offsets = [0, 1], sizes = [4, 384], strides = [1, 1]} : vector<4x512xbf16> to vector<4x384xbf16>
    %cst_11 = arith.constant dense<0.000000e+00> : vector<16x384xf32>
    %14 = tpu.matmul %12, %13, %cst_11 {dimension_numbers = #tpu.dot_dimension_numbers<[1], [0], [0], [1], [0, 0, 1, 1], [], []>} : vector<16x4xbf16>, vector<4x384xbf16>, vector<16x384xf32> -> vector<16x384xf32>
    %15 = arith.addf %10, %14 : vector<16x384xf32>
    %c2 = arith.constant 2 : index
    %c0_12 = arith.constant 0 : index
    %c0_13 = arith.constant 0 : index
    %16 = vector.load %arg2[%c2, %c0_12, %c0_13] : memref<9x16x4xbf16, #tpu.memory_space<vmem>>, vector<1x16x4xbf16>
    %17 = vector.shape_cast %16 : vector<1x16x4xbf16> to vector<16x4xbf16>
    %18 = vector.extract_strided_slice %4 {offsets = [0, 2], sizes = [4, 384], strides = [1, 1]} : vector<4x512xbf16> to vector<4x384xbf16>
    %cst_14 = arith.constant dense<0.000000e+00> : vector<16x384xf32>
    %19 = tpu.matmul %17, %18, %cst_14 {dimension_numbers = #tpu.dot_dimension_numbers<[1], [0], [0], [1], [0, 0, 1, 1], [], []>} : vector<16x4xbf16>, vector<4x384xbf16>, vector<16x384xf32> -> vector<16x384xf32>
    %20 = arith.addf %15, %19 : vector<16x384xf32>
    %c3 = arith.constant 3 : index
    %c0_15 = arith.constant 0 : index
    %c0_16 = arith.constant 0 : index
    %21 = vector.load %arg2[%c3, %c0_15, %c0_16] : memref<9x16x4xbf16, #tpu.memory_space<vmem>>, vector<1x16x4xbf16>
    %22 = vector.shape_cast %21 : vector<1x16x4xbf16> to vector<16x4xbf16>
    %23 = vector.extract_strided_slice %4 {offsets = [0, 18], sizes = [4, 384], strides = [1, 1]} : vector<4x512xbf16> to vector<4x384xbf16>
    %cst_17 = arith.constant dense<0.000000e+00> : vector<16x384xf32>
    %24 = tpu.matmul %22, %23, %cst_17 {dimension_numbers = #tpu.dot_dimension_numbers<[1], [0], [0], [1], [0, 0, 1, 1], [], []>} : vector<16x4xbf16>, vector<4x384xbf16>, vector<16x384xf32> -> vector<16x384xf32>
    %25 = arith.addf %20, %24 : vector<16x384xf32>
    %c4 = arith.constant 4 : index
    %c0_18 = arith.constant 0 : index
    %c0_19 = arith.constant 0 : index
    %26 = vector.load %arg2[%c4, %c0_18, %c0_19] : memref<9x16x4xbf16, #tpu.memory_space<vmem>>, vector<1x16x4xbf16>
    %27 = vector.shape_cast %26 : vector<1x16x4xbf16> to vector<16x4xbf16>
    %28 = vector.extract_strided_slice %4 {offsets = [0, 19], sizes = [4, 384], strides = [1, 1]} : vector<4x512xbf16> to vector<4x384xbf16>
    %cst_20 = arith.constant dense<0.000000e+00> : vector<16x384xf32>
    %29 = tpu.matmul %27, %28, %cst_20 {dimension_numbers = #tpu.dot_dimension_numbers<[1], [0], [0], [1], [0, 0, 1, 1], [], []>} : vector<16x4xbf16>, vector<4x384xbf16>, vector<16x384xf32> -> vector<16x384xf32>
    %30 = arith.addf %25, %29 : vector<16x384xf32>
    %c5 = arith.constant 5 : index
    %c0_21 = arith.constant 0 : index
    %c0_22 = arith.constant 0 : index
    %31 = vector.load %arg2[%c5, %c0_21, %c0_22] : memref<9x16x4xbf16, #tpu.memory_space<vmem>>, vector<1x16x4xbf16>
    %32 = vector.shape_cast %31 : vector<1x16x4xbf16> to vector<16x4xbf16>
    %33 = vector.extract_strided_slice %4 {offsets = [0, 20], sizes = [4, 384], strides = [1, 1]} : vector<4x512xbf16> to vector<4x384xbf16>
    %cst_23 = arith.constant dense<0.000000e+00> : vector<16x384xf32>
    %34 = tpu.matmul %32, %33, %cst_23 {dimension_numbers = #tpu.dot_dimension_numbers<[1], [0], [0], [1], [0, 0, 1, 1], [], []>} : vector<16x4xbf16>, vector<4x384xbf16>, vector<16x384xf32> -> vector<16x384xf32>
    %35 = arith.addf %30, %34 : vector<16x384xf32>
    %c6 = arith.constant 6 : index
    %c0_24 = arith.constant 0 : index
    %c0_25 = arith.constant 0 : index
    %36 = vector.load %arg2[%c6, %c0_24, %c0_25] : memref<9x16x4xbf16, #tpu.memory_space<vmem>>, vector<1x16x4xbf16>
    %37 = vector.shape_cast %36 : vector<1x16x4xbf16> to vector<16x4xbf16>
    %38 = vector.extract_strided_slice %4 {offsets = [0, 36], sizes = [4, 384], strides = [1, 1]} : vector<4x512xbf16> to vector<4x384xbf16>
    %cst_26 = arith.constant dense<0.000000e+00> : vector<16x384xf32>
    %39 = tpu.matmul %37, %38, %cst_26 {dimension_numbers = #tpu.dot_dimension_numbers<[1], [0], [0], [1], [0, 0, 1, 1], [], []>} : vector<16x4xbf16>, vector<4x384xbf16>, vector<16x384xf32> -> vector<16x384xf32>
    %40 = arith.addf %35, %39 : vector<16x384xf32>
    %c7 = arith.constant 7 : index
    %c0_27 = arith.constant 0 : index
    %c0_28 = arith.constant 0 : index
    %41 = vector.load %arg2[%c7, %c0_27, %c0_28] : memref<9x16x4xbf16, #tpu.memory_space<vmem>>, vector<1x16x4xbf16>
    %42 = vector.shape_cast %41 : vector<1x16x4xbf16> to vector<16x4xbf16>
    %43 = vector.extract_strided_slice %4 {offsets = [0, 37], sizes = [4, 384], strides = [1, 1]} : vector<4x512xbf16> to vector<4x384xbf16>
    %cst_29 = arith.constant dense<0.000000e+00> : vector<16x384xf32>
    %44 = tpu.matmul %42, %43, %cst_29 {dimension_numbers = #tpu.dot_dimension_numbers<[1], [0], [0], [1], [0, 0, 1, 1], [], []>} : vector<16x4xbf16>, vector<4x384xbf16>, vector<16x384xf32> -> vector<16x384xf32>
    %45 = arith.addf %40, %44 : vector<16x384xf32>
    %c8 = arith.constant 8 : index
    %c0_30 = arith.constant 0 : index
    %c0_31 = arith.constant 0 : index
    %46 = vector.load %arg2[%c8, %c0_30, %c0_31] : memref<9x16x4xbf16, #tpu.memory_space<vmem>>, vector<1x16x4xbf16>
    %47 = vector.shape_cast %46 : vector<1x16x4xbf16> to vector<16x4xbf16>
    %48 = vector.extract_strided_slice %4 {offsets = [0, 38], sizes = [4, 384], strides = [1, 1]} : vector<4x512xbf16> to vector<4x384xbf16>
    %cst_32 = arith.constant dense<0.000000e+00> : vector<16x384xf32>
    %49 = tpu.matmul %47, %48, %cst_32 {dimension_numbers = #tpu.dot_dimension_numbers<[1], [0], [0], [1], [0, 0, 1, 1], [], []>} : vector<16x4xbf16>, vector<4x384xbf16>, vector<16x384xf32> -> vector<16x384xf32>
    %50 = arith.addf %45, %49 : vector<16x384xf32>
    %51 = arith.truncf %50 : vector<16x384xf32> to vector<16x384xbf16>
    %c0_33 = arith.constant 0 : index
    %c0_34 = arith.constant 0 : index
    %c0_35 = arith.constant 0 : index
    %52 = vector.load %arg5[%c0_33, %c0_34, %c0_35] : memref<1x16x384xbf16, #tpu.memory_space<vmem>>, vector<1x16x384xbf16>
    %53 = vector.shape_cast %52 : vector<1x16x384xbf16> to vector<16x384xbf16>
    %54 = vector.shape_cast %51 : vector<16x384xbf16> to vector<1x16x384xbf16>
    tpu.vector_store %arg5[%c0_33, %c0_34, %c0_35], %54 {strides = array<i32>} : memref<1x16x384xbf16, #tpu.memory_space<vmem>>, vector<1x16x384xbf16>,
    %c384_i32 = arith.constant 384 : i32
    %55 = arith.muli %arg1, %c384_i32 : i32
    %56 = tpu.iota {dimensions = array<i32: 1>} : vector<1x384xi32>
    %57 = vector.broadcast %55 : i32 to vector<1x384xi32>
    %58 = arith.addi %57, %56 : vector<1x384xi32>
    %c288_i32 = arith.constant 288 : i32
    %59 = vector.broadcast %c288_i32 : i32 to vector<1x384xi32>
    %60 = arith.cmpi slt, %58, %59 : vector<1x384xi32>
    %c18_i32 = arith.constant 18 : i32
    %c0_i32 = arith.constant 0 : i32
    %61 = arith.cmpi eq, %c18_i32, %c0_i32 : i32
    %c1_i32 = arith.constant 1 : i32
    %62 = arith.select %61, %c1_i32, %c18_i32 : i32
    %63 = vector.broadcast %62 : i32 to vector<1x384xi32>
    %64 = arith.remsi %58, %63 : vector<1x384xi32>
    %c0_i32_36 = arith.constant 0 : i32
    %65 = vector.broadcast %c0_i32_36 : i32 to vector<1x384xi32>
    %66 = arith.cmpi ne, %64, %65 : vector<1x384xi32>
    %c0_i32_37 = arith.constant 0 : i32
    %67 = vector.broadcast %c0_i32_37 : i32 to vector<1x384xi32>
    %68 = arith.cmpi slt, %64, %67 : vector<1x384xi32>
    %c0_i32_38 = arith.constant 0 : i32
    %69 = arith.cmpi slt, %62, %c0_i32_38 : i32
    %70 = vector.broadcast %69 : i1 to vector<1x384xi1>
    %71 = vector.broadcast %70 : vector<1x384xi1> to vector<1x384xi1>
    %72 = arith.xori %68, %71 : vector<1x384xi1>
    %73 = arith.andi %72, %66 : vector<1x384xi1>
    %74 = vector.broadcast %62 : i32 to vector<1x384xi32>
    %75 = arith.addi %64, %74 : vector<1x384xi32>
    %76 = arith.select %73, %75, %64 : vector<1x384xi1>, vector<1x384xi32>
    %c16_i32 = arith.constant 16 : i32
    %77 = vector.broadcast %c16_i32 : i32 to vector<1x384xi32>
    %78 = arith.cmpi slt, %76, %77 : vector<1x384xi32>
    %79 = arith.andi %60, %78 : vector<1x384xi1>
    %cst_39 = arith.constant 0.000000e+00 : f32
    %80 = vector.shape_cast %79 : vector<1x384xi1> to vector<1x384xi1>
    %81 = vector.broadcast %80 : vector<1x384xi1> to vector<16x384xi1>
    %82 = vector.broadcast %cst_39 : f32 to vector<16x384xf32>
    %83 = arith.select %81, %50, %82 : vector<16x384xi1>, vector<16x384xf32>
    %cst_40 = arith.constant dense<0.000000e+00> : vector<16xf32>
    %84 = vector.multi_reduction <add>, %83, %cst_40 [1] : vector<16x384xf32> to vector<16xf32>
    %85 = vector.shape_cast %84 : vector<16xf32> to vector<16x1xf32>
    %c0_41 = arith.constant 0 : index
    %c0_42 = arith.constant 0 : index
    %c0_43 = arith.constant 0 : index
    %c0_44 = arith.constant 0 : index
    %86 = vector.load %arg6[%c0_41, %c0_42, %c0_43, %c0_44] : memref<1x1x16x1xf32, #tpu.memory_space<vmem>>, vector<1x1x16x1xf32>
    %87 = vector.shape_cast %86 : vector<1x1x16x1xf32> to vector<16x1xf32>
    %88 = vector.shape_cast %85 : vector<16x1xf32> to vector<1x1x16x1xf32>
    tpu.vector_store %arg6[%c0_41, %c0_42, %c0_43, %c0_44], %88 {strides = array<i32>} : memref<1x1x16x1xf32, #tpu.memory_space<vmem>>, vector<1x1x16x1xf32>,
    %89 = arith.mulf %83, %83 : vector<16x384xf32>
    %cst_45 = arith.constant dense<0.000000e+00> : vector<16xf32>
    %90 = vector.multi_reduction <add>, %89, %cst_45 [1] : vector<16x384xf32> to vector<16xf32>
    %91 = vector.shape_cast %90 : vector<16xf32> to vector<16x1xf32>
    %c0_46 = arith.constant 0 : index
    %c0_47 = arith.constant 0 : index
    %c0_48 = arith.constant 0 : index
    %c0_49 = arith.constant 0 : index
    %92 = vector.load %arg7[%c0_46, %c0_47, %c0_48, %c0_49] : memref<1x1x16x1xf32, #tpu.memory_space<vmem>>, vector<1x1x16x1xf32>
    %93 = vector.shape_cast %92 : vector<1x1x16x1xf32> to vector<16x1xf32>
    %94 = vector.shape_cast %91 : vector<16x1xf32> to vector<1x1x16x1xf32>
    tpu.vector_store %arg7[%c0_46, %c0_47, %c0_48, %c0_49], %94 {strides = array<i32>} : memref<1x1x16x1xf32, #tpu.memory_space<vmem>>, vector<1x1x16x1xf32>,
    return
  }
  func.func @transform_0(%arg0: i32, %arg1: i32) -> (i32, i32, i32) {
    %c0_i32 = arith.constant 0 : i32
    %c0_i32_0 = arith.constant 0 : i32
    %c0_i32_1 = arith.constant 0 : i32
    %c0_i32_2 = arith.constant 0 : i32
    return %c0_i32, %c0_i32_0, %c0_i32_1 : i32, i32, i32
  }
  func.func @transform_1(%arg0: i32, %arg1: i32) -> (i32, i32, i32) {
    %c0_i32 = arith.constant 0 : i32
    %c0_i32_0 = arith.constant 0 : i32
    return %arg0, %c0_i32, %arg1 : i32, i32, i32
  }
  func.func @transform_2(%arg0: i32, %arg1: i32) -> (i32, i32, i32) {
    %c1_i32 = arith.constant 1 : i32
    %0 = arith.addi %arg1, %c1_i32 : i32
    %c3_i32 = arith.constant 3 : i32
    %1 = arith.muli %0, %c3_i32 : i32
    %c0_i32 = arith.constant 0 : i32
    %c0_i32_0 = arith.constant 0 : i32
    return %arg0, %c0_i32, %1 : i32, i32, i32
  }
  func.func @transform_3(%arg0: i32, %arg1: i32) -> (i32, i32, i32) {
    %c0_i32 = arith.constant 0 : i32
    %c0_i32_0 = arith.constant 0 : i32
    return %arg0, %c0_i32, %arg1 : i32, i32, i32
  }
  func.func @transform_4(%arg0: i32, %arg1: i32) -> (i32, i32, i32, i32) {
    %c0_i32 = arith.constant 0 : i32
    %c0_i32_0 = arith.constant 0 : i32
    %c0_i32_1 = arith.constant 0 : i32
    return %arg0, %arg1, %c0_i32, %c0_i32_0 : i32, i32, i32, i32
  }
  func.func @transform_5(%arg0: i32, %arg1: i32) -> (i32, i32, i32, i32) {
    %c0_i32 = arith.constant 0 : i32
    %c0_i32_0 = arith.constant 0 : i32
    %c0_i32_1 = arith.constant 0 : i32
    return %arg0, %arg1, %c0_i32, %c0_i32_0 : i32, i32, i32, i32
  }
}

</mosaic_0001>

<llo_original>
// kernel: tpu_custom_call.1
$region0: #{tpu_custom_call.1}
  #allocation0 [shape = 'u32[]', space=smem, size = 0x4, offset = 0x4, fixed_abs, tag = 'smem constant byte address 0x4 - core index']
  #allocation1 [shape = 'u32[144,128]{1,0:T(1,128)}', space=vmem, size = 0x12000, scoped, tag = 'internal scratch']
  %s0 = inlined_call_operand.vmem [shape: bf16[9,16,4], index: 0, kind: input, shape index: {}]
  %s1 = inlined_call_operand.vmem [shape: bf16[2,4,768], index: 1, kind: input, shape index: {}]
  %s2 = inlined_call_operand.vmem [shape: bf16[2,4,768], index: 2, kind: input, shape index: {}]
  %s3 = inlined_call_operand.hbm [shape: bf16[2,16,384], index: 3, kind: output, shape index: {0}]
  %s4 = inlined_call_operand.vmem [shape: f32[2,1,16,1], index: 4, kind: output, shape index: {1}]
  %s5 = inlined_call_operand.vmem [shape: f32[2,1,16,1], index: 5, kind: output, shape index: {2}]
  %6 = xla_tuple %s3, %s4, %s5
  %s7 = sld [smem:[#allocation0]]
  $region61: #{tpu_custom_call.1} parent=0
    _
  %s9 = ssub.s32 1, %s7
  %s10 = scalar_select 0, %s9, %s7
  $region1: #{tpu_custom_call.1} parent=0
    #allocation2 [shape = 'u8[24576]{0}', space=vmem, size = 0x6000, scoped, tag = 'output window, operand 0']
    #allocation3 [shape = 's32[2]{0}', space=sflag, size = 0x8, scoped, tag = 'scoped memory for tpu_custom_call.1']
    %11 = vsyncpa [#allocation3], 0
    %s12 = scalar_lea.sflag [#allocation3], 1
    %13 = vsyncpa %s12, 0
    loop: start=0, step=1, limit=4
    $region2: #{tpu_custom_call.1} parent=1 // loop_pre_header
      _
    $region3: #{tpu_custom_call.1} parent=1 // loop_header
      %s15 = sphi 0, %s19
      %p16 = scmp.ge.s32.totalorder %s15, 4
      %s22 = sphi 0, %s34
      %s23 = sphi 0, %s30
      %s24 = sphi 0, %s22
      %s25 = sphi 0, %s23
      %s26 = sphi 0, %s24
      %s27 = sphi 0, %s25
      %s35 = sphi 0, %s35
      %s37 = sphi 0, %s35
      %s38 = sphi 0, %s37
      %s52 = sphi 0, %s38
      %s60 = sphi 0, %s62
      %s63 = sphi 0, %s60
      %s64 = sphi 0, %s63
      %s80 = sphi 0, %s64
      %s92 = sphi 0, %s94
      %s95 = sphi 0, %s92
      %s96 = sphi 0, %s95
      %s112 = sphi 0, %s96
      %s120 = sphi 0, %s122
      %s123 = sphi 0, %s120
      %s124 = sphi 0, %s123
      %s140 = sphi 0, %s124
      %s148 = sphi 0, %s150
      %s151 = sphi 0, %s148
      %s152 = sphi 0, %s151
      %s168 = sphi 0, %s152
      %s176 = sphi 0, %s178
      %s179 = sphi 0, %s176
      %s180 = sphi 0, %s179
      %s196 = sphi 0, %s180
    $region4: #{tpu_custom_call.1} parent=1 // loop_header_branch
      %18 = sbr.rel (%p16) target = $region8
    $region5: #{tpu_custom_call.1} parent=1 // loop_body
      %s20 = ssub.s32 %s15, 1
      %s21 = ssub.s32 %s15, 2
      %s28 = sadd.s32 1, %s23
      %p29 = scmp.ge.s32.totalorder %s28, 1
      %s30 = scalar_select %p29, 0, %s28
      %s31 = sadd.s32 1, %s22
      %s32 = scalar_select %p29, %s31, %s22
      %p33 = scmp.ge.s32.totalorder %s32, 2
      %s34 = scalar_select %p33, 0, %s32
      %s36 = sadd.s32 %s35, 1
      %p39 = scmp.eq.s32.totalorder %s15, 1
      %p40 = scmp.ne.s32.totalorder %s35, %s37
      %p41 = scmp.eq.s32.totalorder %s15, 0
      %p42 = por %p40, %p41
      %p43 = scmp.ne.s32.totalorder %s35, %s37
      %p44 = scmp.eq.s32.totalorder %s20, 1
      %p45 = por %p43, %p44
      %p46 = scmp.ne.s32.totalorder %s37, %s38
      %p47 = scmp.eq.s32.totalorder %s20, 0
      %p48 = por %p46, %p47
      %p49 = scmp.ne.s32.totalorder %s37, %s38
      %p50 = scmp.eq.s32.totalorder %s21, 1
      %p51 = por %p49, %p50
      %p53 = scmp.ne.s32.totalorder %s38, %s52
      %p54 = scmp.eq.s32.totalorder %s21, 0
      %p55 = por %p53, %p54
      %s56 = ssub.s32 %s22, %s34
      %s57 = ssub.s32 %s23, %s30
      %s58 = sor.u32 %s56, %s57
      %p59 = scmp.eq.s32.totalorder %s58, 0
      %s61 = sadd.s32 %s60, 1
      %s62 = scalar_select %p59, %s60, %s61
      %p65 = pneg %p59
      %p66 = scmp.eq.s32.totalorder %s15, 1
      %p67 = por %p65, %p66
      %p68 = scmp.ne.s32.totalorder %s60, %s63
      %p69 = scmp.eq.s32.totalorder %s15, 0
      %p70 = por %p68, %p69
      %p71 = scmp.ne.s32.totalorder %s60, %s63
      %p72 = scmp.eq.s32.totalorder %s20, 1
      %p73 = por %p71, %p72
      %p74 = scmp.ne.s32.totalorder %s63, %s64
      %p75 = scmp.eq.s32.totalorder %s20, 0
      %p76 = por %p74, %p75
      %p77 = scmp.ne.s32.totalorder %s63, %s64
      %p78 = scmp.eq.s32.totalorder %s21, 1
      %p79 = por %p77, %p78
      %p81 = scmp.ne.s32.totalorder %s64, %s80
      %p82 = scmp.eq.s32.totalorder %s21, 0
      %p83 = por %p81, %p82
      %s84 = sadd.s32 %s23, 1
      %s85 = smul.u32 %s84, 3
      %s86 = sadd.s32 %s30, 1
      %s87 = smul.u32 %s86, 3
      %s88 = ssub.s32 %s22, %s34
      %s89 = ssub.s32 %s85, %s87
      %s90 = sor.u32 %s88, %s89
      %p91 = scmp.eq.s32.totalorder %s90, 0
      %s93 = sadd.s32 %s92, 1
      %s94 = scalar_select %p91, %s92, %s93
      %p97 = pneg %p91
      %p98 = scmp.eq.s32.totalorder %s15, 1
      %p99 = por %p97, %p98
      %p100 = scmp.ne.s32.totalorder %s92, %s95
      %p101 = scmp.eq.s32.totalorder %s15, 0
      %p102 = por %p100, %p101
      %p103 = scmp.ne.s32.totalorder %s92, %s95
      %p104 = scmp.eq.s32.totalorder %s20, 1
      %p105 = por %p103, %p104
      %p106 = scmp.ne.s32.totalorder %s95, %s96
      %p107 = scmp.eq.s32.totalorder %s20, 0
      %p108 = por %p106, %p107
      %p109 = scmp.ne.s32.totalorder %s95, %s96
      %p110 = scmp.eq.s32.totalorder %s21, 1
      %p111 = por %p109, %p110
      %p113 = scmp.ne.s32.totalorder %s96, %s112
      %p114 = scmp.eq.s32.totalorder %s21, 0
      %p115 = por %p113, %p114
      %s116 = ssub.s32 %s22, %s34
      %s117 = ssub.s32 %s23, %s30
      %s118 = sor.u32 %s116, %s117
      %p119 = scmp.eq.s32.totalorder %s118, 0
      %s121 = sadd.s32 %s120, 1
      %s122 = scalar_select %p119, %s120, %s121
      %p125 = pneg %p119
      %p126 = scmp.eq.s32.totalorder %s15, 1
      %p127 = por %p125, %p126
      %p128 = scmp.ne.s32.totalorder %s120, %s123
      %p129 = scmp.eq.s32.totalorder %s15, 0
      %p130 = por %p128, %p129
      %p131 = scmp.ne.s32.totalorder %s120, %s123
      %p132 = scmp.eq.s32.totalorder %s20, 1
      %p133 = por %p131, %p132
      %p134 = scmp.ne.s32.totalorder %s123, %s124
      %p135 = scmp.eq.s32.totalorder %s20, 0
      %p136 = por %p134, %p135
      %p137 = scmp.ne.s32.totalorder %s123, %s124
      %p138 = scmp.eq.s32.totalorder %s21, 1
      %p139 = por %p137, %p138
      %p141 = scmp.ne.s32.totalorder %s124, %s140
      %p142 = scmp.eq.s32.totalorder %s21, 0
      %p143 = por %p141, %p142
      %s144 = ssub.s32 %s22, %s34
      %s145 = ssub.s32 %s23, %s30
      %s146 = sor.u32 %s144, %s145
      %p147 = scmp.eq.s32.totalorder %s146, 0
      %s149 = sadd.s32 %s148, 1
      %s150 = scalar_select %p147, %s148, %s149
      %p153 = pneg %p147
      %p154 = scmp.eq.s32.totalorder %s15, 1
      %p155 = por %p153, %p154
      %p156 = scmp.ne.s32.totalorder %s148, %s151
      %p157 = scmp.eq.s32.totalorder %s15, 0
      %p158 = por %p156, %p157
      %p159 = scmp.ne.s32.totalorder %s148, %s151
      %p160 = scmp.eq.s32.totalorder %s20, 1
      %p161 = por %p159, %p160
      %p162 = scmp.ne.s32.totalorder %s151, %s152
      %p163 = scmp.eq.s32.totalorder %s20, 0
      %p164 = por %p162, %p163
      %p165 = scmp.ne.s32.totalorder %s151, %s152
      %p166 = scmp.eq.s32.totalorder %s21, 1
      %p167 = por %p165, %p166
      %p169 = scmp.ne.s32.totalorder %s152, %s168
      %p170 = scmp.eq.s32.totalorder %s21, 0
      %p171 = por %p169, %p170
      %s172 = ssub.s32 %s22, %s34
      %s173 = ssub.s32 %s23, %s30
      %s174 = sor.u32 %s172, %s173
      %p175 = scmp.eq.s32.totalorder %s174, 0
      %s177 = sadd.s32 %s176, 1
      %s178 = scalar_select %p175, %s176, %s177
      %p181 = pneg %p175
      %p182 = scmp.eq.s32.totalorder %s15, 1
      %p183 = por %p181, %p182
      %p184 = scmp.ne.s32.totalorder %s176, %s179
      %p185 = scmp.eq.s32.totalorder %s15, 0
      %p186 = por %p184, %p185
      %p187 = scmp.ne.s32.totalorder %s176, %s179
      %p188 = scmp.eq.s32.totalorder %s20, 1
      %p189 = por %p187, %p188
      %p190 = scmp.ne.s32.totalorder %s179, %s180
      %p191 = scmp.eq.s32.totalorder %s20, 0
      %p192 = por %p190, %p191
      %p193 = scmp.ne.s32.totalorder %s179, %s180
      %p194 = scmp.eq.s32.totalorder %s21, 1
      %p195 = por %p193, %p194
      %p197 = scmp.ne.s32.totalorder %s180, %s196
      %p198 = scmp.eq.s32.totalorder %s21, 0
      %p199 = por %p197, %p198
      %p200 = scmp.le.s32.totalorder 1, %s15
      %p201 = scmp.lt.s32.totalorder %s15, 3
      %p202 = pnand %p200, %p201
      %p203 = pneg %p202
      // Predicated region
      $region9: #{tpu_custom_call.1} parent=5 // pred_check
        _
      $region10: #{tpu_custom_call.1} parent=5 // pred_check_branch
        %205 = sbr.rel (%p202) target = $region12
      $region11: #{tpu_custom_call.1} parent=5 // pred_region
        %s206 = ssub.s32 %s15, 1
        // Predicated region
        $region13: #{tpu_custom_call.1} parent=11 // pred_check
          %p207 = pneg %p48
        $region14: #{tpu_custom_call.1} parent=11 // pred_check_branch
          %209 = sbr.rel (%p207) target = $region16
        $region15: #{tpu_custom_call.1} parent=11 // pred_region
          _
        $region16: #{tpu_custom_call.1} parent=11 // pred_fallthru
          _
      $region12: #{tpu_custom_call.1} parent=5 // pred_fallthru
        _
      %p210 = scmp.lt.s32.totalorder %s15, 2
      // Predicated region
      $region17: #{tpu_custom_call.1} parent=5 // pred_check
        %p211 = pneg %p210
      $region18: #{tpu_custom_call.1} parent=5 // pred_check_branch
        %213 = sbr.rel (%p211) target = $region20
      $region19: #{tpu_custom_call.1} parent=5 // pred_region
        // Predicated region
        $region21: #{tpu_custom_call.1} parent=19 // pred_check
          %p214 = pneg %p70
        $region22: #{tpu_custom_call.1} parent=19 // pred_check_branch
          %216 = sbr.rel (%p214) target = $region24
        $region23: #{tpu_custom_call.1} parent=19 // pred_region
          %s217 = smul.u32 3, %s23
          %p218 = scmp.lt.s32.totalorder %s22, 1
          %s219 = scalar_select %p218, %s22, 1
          %p220 = scmp.lt.s32.totalorder %s217, 5
          %s221 = scalar_select %p220, %s217, 5
          %s222 = smul.addr %s219, 6
          %s223 = sadd.s32 %s221, %s222
          %s224 = smul.addr %s223, 2
          %s225 = scalar_lea.vmem %s1, %s224
          %s226 = smul.u32 3, %s23
        $region24: #{tpu_custom_call.1} parent=19 // pred_fallthru
          _
        // Predicated region
        $region25: #{tpu_custom_call.1} parent=19 // pred_check
          %p227 = pneg %p102
        $region26: #{tpu_custom_call.1} parent=19 // pred_check_branch
          %229 = sbr.rel (%p227) target = $region28
        $region27: #{tpu_custom_call.1} parent=19 // pred_region
          %s230 = sadd.s32 %s23, 1
          %s231 = smul.u32 %s230, 3
          %p232 = scmp.lt.s32.totalorder %s22, 1
          %s233 = scalar_select %p232, %s22, 1
          %p234 = scmp.lt.s32.totalorder %s231, 5
          %s235 = scalar_select %p234, %s231, 5
          %s236 = smul.addr %s233, 6
          %s237 = sadd.s32 %s235, %s236
          %s238 = smul.addr %s237, 2
          %s239 = scalar_lea.vmem %s2, %s238
          %s240 = sadd.s32 %s23, 1
          %s241 = smul.u32 %s240, 3
        $region28: #{tpu_custom_call.1} parent=19 // pred_fallthru
          _
      $region20: #{tpu_custom_call.1} parent=5 // pred_fallthru
        _
      %p242 = scmp.le.s32.totalorder 1, %s15
      %p243 = scmp.lt.s32.totalorder %s15, 3
      %p244 = pnand %p242, %p243
      %p245 = pneg %p244
      // Predicated region
      $region29: #{tpu_custom_call.1} parent=5 // pred_check
        _
      $region30: #{tpu_custom_call.1} parent=5 // pred_check_branch
        %247 = sbr.rel (%p244) target = $region32
      $region31: #{tpu_custom_call.1} parent=5 // pred_region
        %s248 = ssub.s32 %s15, 1
        %p249 = pneg %p48
        %p250 = pneg %p45
        %s251 = smul.u32 3, %s25
        %p252 = scmp.lt.s32.totalorder %s24, 1
        %s253 = scalar_select %p252, %s24, 1
        %p254 = scmp.lt.s32.totalorder %s251, 5
        %s255 = scalar_select %p254, %s251, 5
        %s256 = smul.addr %s253, 6
        %s257 = sadd.s32 %s255, %s256
        %s258 = smul.addr %s257, 2
        %s259 = scalar_lea.vmem %s1, %s258
        %p260 = pneg %p76
        %p261 = pneg %p73
        %s262 = sadd.s32 %s25, 1
        %s263 = smul.u32 %s262, 3
        %p264 = scmp.lt.s32.totalorder %s24, 1
        %s265 = scalar_select %p264, %s24, 1
        %p266 = scmp.lt.s32.totalorder %s263, 5
        %s267 = scalar_select %p266, %s263, 5
        %s268 = smul.addr %s265, 6
        %s269 = sadd.s32 %s267, %s268
        %s270 = smul.addr %s269, 2
        %s271 = scalar_lea.vmem %s2, %s270
        %p272 = pneg %p108
        %p273 = pneg %p105
        %p274 = pneg %p136
        %p275 = pneg %p133
        %s276 = sand.u32 %s123, 1
        %s277 = scalar_lea.sflag [#allocation3], %s276
        %s278 = sand.u32 %s123, 1
        %s279 = smul.addr %s278, 24
        %s280 = scalar_lea.vmem [#allocation2], %s279
        %p281 = pneg %p164
        %p282 = pneg %p161
        %p283 = scmp.lt.s32.totalorder %s24, 1
        %s284 = scalar_select %p283, %s24, 1
        %p285 = scmp.lt.s32.totalorder %s25, 0
        %s286 = scalar_select %p285, %s25, 0
        %s287 = smul.addr %s286, 2
        %s288 = smul.addr %s284, 2
        %s289 = sadd.s32 %s287, %s288
        %s290 = smul.addr %s289, 8
        %s291 = scalar_lea.vmem %s4, %s290
        %p292 = pneg %p192
        %p293 = pneg %p189
        %p294 = scmp.lt.s32.totalorder %s24, 1
        %s295 = scalar_select %p294, %s24, 1
        %p296 = scmp.lt.s32.totalorder %s25, 0
        %s297 = scalar_select %p296, %s25, 0
        %s298 = smul.addr %s297, 2
        %s299 = smul.addr %s295, 2
        %s300 = sadd.s32 %s298, %s299
        %s301 = smul.addr %s300, 8
        %s302 = scalar_lea.vmem %s5, %s301
        %s303 = smul.u32 3, %s25
        %p304 = scmp.lt.s32.totalorder %s24, 1
        %s305 = scalar_select %p304, %s24, 1
        %p306 = scmp.lt.s32.totalorder %s303, 5
        %s307 = scalar_select %p306, %s303, 5
        %s308 = smul.addr %s305, 6
        %s309 = sadd.s32 %s307, %s308
        %s310 = smul.addr %s309, 2
        %s311 = scalar_lea.vmem %s1, %s310
        %s312 = smul.u32 3, %s25
        %s313 = sadd.s32 %s25, 1
        %s314 = smul.u32 %s313, 3
        %p315 = scmp.lt.s32.totalorder %s24, 1
        %s316 = scalar_select %p315, %s24, 1
        %p317 = scmp.lt.s32.totalorder %s314, 5
        %s318 = scalar_select %p317, %s314, 5
        %s319 = smul.addr %s316, 6
        %s320 = sadd.s32 %s318, %s319
        %s321 = smul.addr %s320, 2
        %s322 = scalar_lea.vmem %s2, %s321
        %s323 = sadd.s32 %s25, 1
        %s324 = smul.u32 %s323, 3
        %s325 = smul.u32 3, %s25
        %p326 = scmp.lt.s32.totalorder %s24, 1
        %s327 = scalar_select %p326, %s24, 1
        %p328 = scmp.lt.s32.totalorder %s25, 0
        %s329 = scalar_select %p328, %s25, 0
        %s330 = smul.addr %s329, 2
        %s331 = smul.addr %s327, 2
        %s332 = sadd.s32 %s330, %s331
        %s333 = smul.addr %s332, 8
        %s334 = scalar_lea.vmem %s4, %s333
        %p335 = scmp.lt.s32.totalorder %s24, 1
        %s336 = scalar_select %p335, %s24, 1
        %p337 = scmp.lt.s32.totalorder %s25, 0
        %s338 = scalar_select %p337, %s25, 0
        %s339 = smul.addr %s338, 2
        %s340 = smul.addr %s336, 2
        %s341 = sadd.s32 %s339, %s340
        %s342 = smul.addr %s341, 8
        %s343 = scalar_lea.vmem %s5, %s342
        %v345 = vld [vmem:[%s311] sm:$0x3f]
        %v346 = vld [vmem:[%s322] sm:$0x3]
        %v348 = vcombine.high %v345, %v345
        %v350 = vunpack.c.l.s4 1983009808
        %v351 = vunpack.c.0.s8 %v350
        %v352 = vlaneseq
        %v353 = vshrl.u32 %v352, 7
        %v354 = vsub.s32 %v351, %v353
        %v355 = vrot.slane %v345, %v354
        %v357 = vunpack.c.l.s4 1983009808
        %v358 = vunpack.c.0.s8 %v357
        %v359 = vlaneseq
        %v360 = vshrl.u32 %v359, 7
        %v361 = vsub.s32 %v358, %v360
        %v362 = vrot.slane %v348, %v361
        %v363 = vcombine.high %v355, %v355
        %v364 = vld [vmem:[%s0] sm:$0xf]
        %v365 = vld [vmem:[%s0 + $0x4] sm:$0xf]
        %s366 = scalar_lea.vmem %s0, 8
        %v367 = vld [vmem:[%s366] sm:$0xf]
        %v368 = vld [vmem:[%s366 + $0x4] sm:$0xf]
        %v371 = vunpack.c.l.b16 %v367
        %v372 = vunpack.c.l.b16 %v368
        %v373 = vpack.c.b16 %v372, %v371
        %375 = vrot.lane.b32.xlu0 %v355, 127
        %v376 = vpop.permute.xlu0 %375
        %377 = vrot.lane.b32.xlu0 %v363, 127
        %v378 = vpop.permute.xlu0 %377
        %379 = vrot.lane.b32.xlu0 %v362, 127
        %v380 = vpop.permute.xlu0 %379
        %381 = vrot.lane.b32.xlu0 %v346, 127
        %v382 = vpop.permute.xlu0 %381
        %vm383 = vcmask 1039360
        %v384 = vsel %vm383, %v376, %v378
        %v385 = vsel %vm383, %v378, %v380
        %v386 = vsel %vm383, %v380, %v382
        %vm387 = vcmask 31744
        %v389 = vsel %vm387, %v373, 0
        %vm391 = vcmask 1041408
        %v393 = vsel %vm391, %v384, 0
        %v396 = vsel %vm391, %v385, 0
        %v399 = vsel %vm391, %v386, 0
        %401 = vmatprep.subr.bf16.mxu0 0
        %402 = vmatpush1.bf16.msra.mxu0 0
        %403 = vmatprep.subr.bf16.mxu0 0
        %404 = vmatpush1.bf16.msra.mxu0 0
        %405 = vmatprep.subr.bf16.mxu0 0
        %406 = vmatpush1.bf16.msra.mxu0 0
        %407 = vmatprep.subr.bf16.mxu0 0
        %408 = vmatpush1.bf16.msra.mxu0 0
        %409 = vmatprep.subr.bf16.mxu0 0
        %410 = vmatpush1.bf16.msra.mxu0 0
        %411 = vmatprep.subr.bf16.mxu0 0
        %412 = vmatpush1.bf16.msra.mxu0 0
        %413 = vmatprep.subr.bf16.mxu0 0
        %414 = vmatpush1.bf16.msra.mxu0 0
        %415 = vmatprep.subr.bf16.mxu0 %v396
        %416 = vmatpush1.bf16.msra.mxu0 %v393
        %417 = vmatprep.subr.bf16.mxu0 0
        %418 = vmatpush2.bf16.msra.mxu0 0
        %419 = vmatprep.subr.bf16.mxu0 0
        %420 = vmatpush2.bf16.msra.mxu0 0
        %421 = vmatprep.subr.bf16.mxu0 0
        %422 = vmatpush2.bf16.msra.mxu0 0
        %423 = vmatprep.subr.bf16.mxu0 0
        %424 = vmatpush2.bf16.msra.mxu0 0
        %425 = vmatprep.subr.bf16.mxu0 0
        %426 = vmatpush2.bf16.msra.mxu0 0
        %427 = vmatprep.subr.bf16.mxu0 0
        %428 = vmatpush2.bf16.msra.mxu0 0
        %429 = vmatprep.subr.bf16.mxu0 0
        %430 = vmatpush2.bf16.msra.mxu0 0
        %431 = vmatprep.subr.bf16.mxu0 0
        %432 = vmatpush2.bf16.msra.mxu0 0
        %433 = vmatprep.mubr.bf16.mxu0 0
        %434 = vmatmul.mubr.bf16.gmra.mxu0 %v389
        %v435 = vpop.f32.mrf.mxu0
        %v436 = vadd.f32 0.0, %v435
        %v437 = vpop.f32.mrf.mxu0
        %v438 = vadd.f32 0.0, %v437
        %v439 = vpop.f32.mrf.mxu0
        %v440 = vadd.f32 0.0, %v439
        %v441 = vpop.f32.mrf.mxu0
        %v442 = vadd.f32 0.0, %v441
        %443 = vdwg.mxu0
        %444 = vmatprep.subr.bf16.mxu0 0
        %445 = vmatpush1.bf16.msra.mxu0 0
        %446 = vmatprep.subr.bf16.mxu0 0
        %447 = vmatpush1.bf16.msra.mxu0 0
        %448 = vmatprep.subr.bf16.mxu0 0
        %449 = vmatpush1.bf16.msra.mxu0 0
        %450 = vmatprep.subr.bf16.mxu0 0
        %451 = vmatpush1.bf16.msra.mxu0 0
        %452 = vmatprep.subr.bf16.mxu0 0
        %453 = vmatpush1.bf16.msra.mxu0 0
        %454 = vmatprep.subr.bf16.mxu0 0
        %455 = vmatpush1.bf16.msra.mxu0 0
        %456 = vmatprep.subr.bf16.mxu0 0
        %457 = vmatpush1.bf16.msra.mxu0 0
        %458 = vmatprep.subr.bf16.mxu0 0
        %459 = vmatpush1.bf16.msra.mxu0 %v399
        %460 = vmatprep.subr.bf16.mxu0 0
        %461 = vmatpush2.bf16.msra.mxu0 0
        %462 = vmatprep.subr.bf16.mxu0 0
        %463 = vmatpush2.bf16.msra.mxu0 0
        %464 = vmatprep.subr.bf16.mxu0 0
        %465 = vmatpush2.bf16.msra.mxu0 0
        %466 = vmatprep.subr.bf16.mxu0 0
        %467 = vmatpush2.bf16.msra.mxu0 0
        %468 = vmatprep.subr.bf16.mxu0 0
        %469 = vmatpush2.bf16.msra.mxu0 0
        %470 = vmatprep.subr.bf16.mxu0 0
        %471 = vmatpush2.bf16.msra.mxu0 0
        %472 = vmatprep.subr.bf16.mxu0 0
        %473 = vmatpush2.bf16.msra.mxu0 0
        %474 = vmatprep.subr.bf16.mxu0 0
        %475 = vmatpush2.bf16.msra.mxu0 0
        %476 = vmatprep.mubr.bf16.mxu0 0
        %477 = vmatmul.mubr.bf16.gmra.mxu0 %v389
        %v478 = vpop.f32.mrf.mxu0
        %v479 = vadd.f32 0.0, %v478
        %v480 = vpop.f32.mrf.mxu0
        %v481 = vpop.f32.mrf.mxu0
        %v482 = vadd.f32 0.0, %v481
        %v483 = vpop.f32.mrf.mxu0
        %484 = vdwg.mxu0
        %v487 = vunpack.c.l.b16 %v364
        %v488 = vunpack.c.l.b16 %v365
        %v489 = vpack.c.b16 %v488, %v487
        %v491 = vsel %vm387, %v489, 0
        %v494 = vsel %vm391, %v355, 0
        %v497 = vsel %vm391, %v363, 0
        %v500 = vsel %vm391, %v362, 0
        %502 = vmatprep.subr.bf16.mxu0 0
        %503 = vmatpush1.bf16.msra.mxu0 0
        %504 = vmatprep.subr.bf16.mxu0 0
        %505 = vmatpush1.bf16.msra.mxu0 0
        %506 = vmatprep.subr.bf16.mxu0 0
        %507 = vmatpush1.bf16.msra.mxu0 0
        %508 = vmatprep.subr.bf16.mxu0 0
        %509 = vmatpush1.bf16.msra.mxu0 0
        %510 = vmatprep.subr.bf16.mxu0 0
        %511 = vmatpush1.bf16.msra.mxu0 0
        %512 = vmatprep.subr.bf16.mxu0 0
        %513 = vmatpush1.bf16.msra.mxu0 0
        %514 = vmatprep.subr.bf16.mxu0 0
        %515 = vmatpush1.bf16.msra.mxu0 0
        %516 = vmatprep.subr.bf16.mxu0 %v497
        %517 = vmatpush1.bf16.msra.mxu0 %v494
        %518 = vmatprep.subr.bf16.mxu0 0
        %519 = vmatpush2.bf16.msra.mxu0 0
        %520 = vmatprep.subr.bf16.mxu0 0
        %521 = vmatpush2.bf16.msra.mxu0 0
        %522 = vmatprep.subr.bf16.mxu0 0
        %523 = vmatpush2.bf16.msra.mxu0 0
        %524 = vmatprep.subr.bf16.mxu0 0
        %525 = vmatpush2.bf16.msra.mxu0 0
        %526 = vmatprep.subr.bf16.mxu0 0
        %527 = vmatpush2.bf16.msra.mxu0 0
        %528 = vmatprep.subr.bf16.mxu0 0
        %529 = vmatpush2.bf16.msra.mxu0 0
        %530 = vmatprep.subr.bf16.mxu0 0
        %531 = vmatpush2.bf16.msra.mxu0 0
        %532 = vmatprep.subr.bf16.mxu0 0
        %533 = vmatpush2.bf16.msra.mxu0 0
        %534 = vmatprep.mubr.bf16.mxu0 0
        %535 = vmatmul.mubr.bf16.gmra.mxu0 %v491
        %v536 = vpop.f32.mrf.mxu0
        %v537 = vadd.f32 %v436, %v536
        %v538 = vpop.f32.mrf.mxu0
        %v539 = vadd.f32 %v438, %v538
        %v540 = vpop.f32.mrf.mxu0
        %v541 = vadd.f32 %v440, %v540
        %v542 = vpop.f32.mrf.mxu0
        %v543 = vadd.f32 %v442, %v542
        %544 = vdwg.mxu0
        %545 = vmatprep.subr.bf16.mxu0 0
        %546 = vmatpush1.bf16.msra.mxu0 0
        %547 = vmatprep.subr.bf16.mxu0 0
        %548 = vmatpush1.bf16.msra.mxu0 0
        %549 = vmatprep.subr.bf16.mxu0 0
        %550 = vmatpush1.bf16.msra.mxu0 0
        %551 = vmatprep.subr.bf16.mxu0 0
        %552 = vmatpush1.bf16.msra.mxu0 0
        %553 = vmatprep.subr.bf16.mxu0 0
        %554 = vmatpush1.bf16.msra.mxu0 0
        %555 = vmatprep.subr.bf16.mxu0 0
        %556 = vmatpush1.bf16.msra.mxu0 0
        %557 = vmatprep.subr.bf16.mxu0 0
        %558 = vmatpush1.bf16.msra.mxu0 0
        %559 = vmatprep.subr.bf16.mxu0 0
        %560 = vmatpush1.bf16.msra.mxu0 %v500
        %561 = vmatprep.subr.bf16.mxu0 0
        %562 = vmatpush2.bf16.msra.mxu0 0
        %563 = vmatprep.subr.bf16.mxu0 0
        %564 = vmatpush2.bf16.msra.mxu0 0
        %565 = vmatprep.subr.bf16.mxu0 0
        %566 = vmatpush2.bf16.msra.mxu0 0
        %567 = vmatprep.subr.bf16.mxu0 0
        %568 = vmatpush2.bf16.msra.mxu0 0
        %569 = vmatprep.subr.bf16.mxu0 0
        %570 = vmatpush2.bf16.msra.mxu0 0
        %571 = vmatprep.subr.bf16.mxu0 0
        %572 = vmatpush2.bf16.msra.mxu0 0
        %573 = vmatprep.subr.bf16.mxu0 0
        %574 = vmatpush2.bf16.msra.mxu0 0
        %575 = vmatprep.subr.bf16.mxu0 0
        %576 = vmatpush2.bf16.msra.mxu0 0
        %577 = vmatprep.mubr.bf16.mxu0 0
        %578 = vmatmul.mubr.bf16.gmra.mxu0 %v491
        %v579 = vpop.f32.mrf.mxu0
        %v580 = vadd.f32 %v479, %v579
        %v581 = vpop.f32.mrf.mxu0
        %v582 = vpop.f32.mrf.mxu0
        %v583 = vadd.f32 %v482, %v582
        %v584 = vpop.f32.mrf.mxu0
        %585 = vdwg.mxu0
        %s586 = scalar_lea.vmem %s0, 16
        %v587 = vld [vmem:[%s586] sm:$0xf]
        %v588 = vld [vmem:[%s586 + $0x4] sm:$0xf]
        %v591 = vunpack.c.l.b16 %v587
        %v592 = vunpack.c.l.b16 %v588
        %v593 = vpack.c.b16 %v592, %v591
        %594 = vrot.lane.b32.xlu0 %v355, 126
        %v595 = vpop.permute.xlu0 %594
        %596 = vrot.lane.b32.xlu0 %v363, 126
        %v597 = vpop.permute.xlu0 %596
        %598 = vrot.lane.b32.xlu0 %v362, 126
        %v599 = vpop.permute.xlu0 %598
        %600 = vrot.lane.b32.xlu0 %v346, 126
        %v601 = vpop.permute.xlu0 %600
        %vm602 = vcmask 1031168
        %v603 = vsel %vm602, %v595, %v597
        %v604 = vsel %vm602, %v597, %v599
        %v605 = vsel %vm602, %v599, %v601
        %v607 = vsel %vm387, %v593, 0
        %v610 = vsel %vm391, %v603, 0
        %v613 = vsel %vm391, %v604, 0
        %v616 = vsel %vm391, %v605, 0
        %618 = vmatprep.subr.bf16.mxu0 0
        %619 = vmatpush1.bf16.msra.mxu0 0
        %620 = vmatprep.subr.bf16.mxu0 0
        %621 = vmatpush1.bf16.msra.mxu0 0
        %622 = vmatprep.subr.bf16.mxu0 0
        %623 = vmatpush1.bf16.msra.mxu0 0
        %624 = vmatprep.subr.bf16.mxu0 0
        %625 = vmatpush1.bf16.msra.mxu0 0
        %626 = vmatprep.subr.bf16.mxu0 0
        %627 = vmatpush1.bf16.msra.mxu0 0
        %628 = vmatprep.subr.bf16.mxu0 0
        %629 = vmatpush1.bf16.msra.mxu0 0
        %630 = vmatprep.subr.bf16.mxu0 0
        %631 = vmatpush1.bf16.msra.mxu0 0
        %632 = vmatprep.subr.bf16.mxu0 %v613
        %633 = vmatpush1.bf16.msra.mxu0 %v610
        %634 = vmatprep.subr.bf16.mxu0 0
        %635 = vmatpush2.bf16.msra.mxu0 0
        %636 = vmatprep.subr.bf16.mxu0 0
        %637 = vmatpush2.bf16.msra.mxu0 0
        %638 = vmatprep.subr.bf16.mxu0 0
        %639 = vmatpush2.bf16.msra.mxu0 0
        %640 = vmatprep.subr.bf16.mxu0 0
        %641 = vmatpush2.bf16.msra.mxu0 0
        %642 = vmatprep.subr.bf16.mxu0 0
        %643 = vmatpush2.bf16.msra.mxu0 0
        %644 = vmatprep.subr.bf16.mxu0 0
        %645 = vmatpush2.bf16.msra.mxu0 0
        %646 = vmatprep.subr.bf16.mxu0 0
        %647 = vmatpush2.bf16.msra.mxu0 0
        %648 = vmatprep.subr.bf16.mxu0 0
        %649 = vmatpush2.bf16.msra.mxu0 0
        %650 = vmatprep.mubr.bf16.mxu0 0
        %651 = vmatmul.mubr.bf16.gmra.mxu0 %v607
        %v652 = vpop.f32.mrf.mxu0
        %v653 = vadd.f32 0.0, %v652
        %v654 = vpop.f32.mrf.mxu0
        %v655 = vadd.f32 0.0, %v654
        %v656 = vpop.f32.mrf.mxu0
        %v657 = vadd.f32 0.0, %v656
        %v658 = vpop.f32.mrf.mxu0
        %v659 = vadd.f32 0.0, %v658
        %660 = vdwg.mxu0
        %661 = vmatprep.subr.bf16.mxu0 0
        %662 = vmatpush1.bf16.msra.mxu0 0
        %663 = vmatprep.subr.bf16.mxu0 0
        %664 = vmatpush1.bf16.msra.mxu0 0
        %665 = vmatprep.subr.bf16.mxu0 0
        %666 = vmatpush1.bf16.msra.mxu0 0
        %667 = vmatprep.subr.bf16.mxu0 0
        %668 = vmatpush1.bf16.msra.mxu0 0
        %669 = vmatprep.subr.bf16.mxu0 0
        %670 = vmatpush1.bf16.msra.mxu0 0
        %671 = vmatprep.subr.bf16.mxu0 0
        %672 = vmatpush1.bf16.msra.mxu0 0
        %673 = vmatprep.subr.bf16.mxu0 0
        %674 = vmatpush1.bf16.msra.mxu0 0
        %675 = vmatprep.subr.bf16.mxu0 0
        %676 = vmatpush1.bf16.msra.mxu0 %v616
        %677 = vmatprep.subr.bf16.mxu0 0
        %678 = vmatpush2.bf16.msra.mxu0 0
        %679 = vmatprep.subr.bf16.mxu0 0
        %680 = vmatpush2.bf16.msra.mxu0 0
        %681 = vmatprep.subr.bf16.mxu0 0
        %682 = vmatpush2.bf16.msra.mxu0 0
        %683 = vmatprep.subr.bf16.mxu0 0
        %684 = vmatpush2.bf16.msra.mxu0 0
        %685 = vmatprep.subr.bf16.mxu0 0
        %686 = vmatpush2.bf16.msra.mxu0 0
        %687 = vmatprep.subr.bf16.mxu0 0
        %688 = vmatpush2.bf16.msra.mxu0 0
        %689 = vmatprep.subr.bf16.mxu0 0
        %690 = vmatpush2.bf16.msra.mxu0 0
        %691 = vmatprep.subr.bf16.mxu0 0
        %692 = vmatpush2.bf16.msra.mxu0 0
        %693 = vmatprep.mubr.bf16.mxu0 0
        %694 = vmatmul.mubr.bf16.gmra.mxu0 %v607
        %v695 = vpop.f32.mrf.mxu0
        %v696 = vadd.f32 0.0, %v695
        %v697 = vpop.f32.mrf.mxu0
        %v698 = vpop.f32.mrf.mxu0
        %v699 = vadd.f32 0.0, %v698
        %v700 = vpop.f32.mrf.mxu0
        %701 = vdwg.mxu0
        %v702 = vadd.f32 %v537, %v653
        %v703 = vadd.f32 %v539, %v655
        %v704 = vadd.f32 %v580, %v696
        %v705 = vadd.f32 %v541, %v657
        %v706 = vadd.f32 %v543, %v659
        %v707 = vadd.f32 %v583, %v699
        %s708 = scalar_lea.vmem %s0, 24
        %v709 = vld [vmem:[%s708] sm:$0xf]
        %v710 = vld [vmem:[%s708 + $0x4] sm:$0xf]
        %v713 = vunpack.c.l.b16 %v709
        %v714 = vunpack.c.l.b16 %v710
        %v715 = vpack.c.b16 %v714, %v713
        %716 = vrot.lane.b32.xlu0 %v355, 110
        %v717 = vpop.permute.xlu0 %716
        %718 = vrot.lane.b32.xlu0 %v363, 110
        %v719 = vpop.permute.xlu0 %718
        %720 = vrot.lane.b32.xlu0 %v362, 110
        %v721 = vpop.permute.xlu0 %720
        %722 = vrot.lane.b32.xlu0 %v346, 110
        %v723 = vpop.permute.xlu0 %722
        %vm724 = vcmask 900096
        %v725 = vsel %vm724, %v717, %v719
        %v726 = vsel %vm724, %v719, %v721
        %v727 = vsel %vm724, %v721, %v723
        %v729 = vsel %vm387, %v715, 0
        %v732 = vsel %vm391, %v725, 0
        %v735 = vsel %vm391, %v726, 0
        %v738 = vsel %vm391, %v727, 0
        %740 = vmatprep.subr.bf16.mxu0 0
        %741 = vmatpush1.bf16.msra.mxu0 0
        %742 = vmatprep.subr.bf16.mxu0 0
        %743 = vmatpush1.bf16.msra.mxu0 0
        %744 = vmatprep.subr.bf16.mxu0 0
        %745 = vmatpush1.bf16.msra.mxu0 0
        %746 = vmatprep.subr.bf16.mxu0 0
        %747 = vmatpush1.bf16.msra.mxu0 0
        %748 = vmatprep.subr.bf16.mxu0 0
        %749 = vmatpush1.bf16.msra.mxu0 0
        %750 = vmatprep.subr.bf16.mxu0 0
        %751 = vmatpush1.bf16.msra.mxu0 0
        %752 = vmatprep.subr.bf16.mxu0 0
        %753 = vmatpush1.bf16.msra.mxu0 0
        %754 = vmatprep.subr.bf16.mxu0 %v735
        %755 = vmatpush1.bf16.msra.mxu0 %v732
        %756 = vmatprep.subr.bf16.mxu0 0
        %757 = vmatpush2.bf16.msra.mxu0 0
        %758 = vmatprep.subr.bf16.mxu0 0
        %759 = vmatpush2.bf16.msra.mxu0 0
        %760 = vmatprep.subr.bf16.mxu0 0
        %761 = vmatpush2.bf16.msra.mxu0 0
        %762 = vmatprep.subr.bf16.mxu0 0
        %763 = vmatpush2.bf16.msra.mxu0 0
        %764 = vmatprep.subr.bf16.mxu0 0
        %765 = vmatpush2.bf16.msra.mxu0 0
        %766 = vmatprep.subr.bf16.mxu0 0
        %767 = vmatpush2.bf16.msra.mxu0 0
        %768 = vmatprep.subr.bf16.mxu0 0
        %769 = vmatpush2.bf16.msra.mxu0 0
        %770 = vmatprep.subr.bf16.mxu0 0
        %771 = vmatpush2.bf16.msra.mxu0 0
        %772 = vmatprep.mubr.bf16.mxu0 0
        %773 = vmatmul.mubr.bf16.gmra.mxu0 %v729
        %v774 = vpop.f32.mrf.mxu0
        %v775 = vadd.f32 0.0, %v774
        %v776 = vpop.f32.mrf.mxu0
        %v777 = vadd.f32 0.0, %v776
        %v778 = vpop.f32.mrf.mxu0
        %v779 = vadd.f32 0.0, %v778
        %v780 = vpop.f32.mrf.mxu0
        %v781 = vadd.f32 0.0, %v780
        %782 = vdwg.mxu0
        %783 = vmatprep.subr.bf16.mxu0 0
        %784 = vmatpush1.bf16.msra.mxu0 0
        %785 = vmatprep.subr.bf16.mxu0 0
        %786 = vmatpush1.bf16.msra.mxu0 0
        %787 = vmatprep.subr.bf16.mxu0 0
        %788 = vmatpush1.bf16.msra.mxu0 0
        %789 = vmatprep.subr.bf16.mxu0 0
        %790 = vmatpush1.bf16.msra.mxu0 0
        %791 = vmatprep.subr.bf16.mxu0 0
        %792 = vmatpush1.bf16.msra.mxu0 0
        %793 = vmatprep.subr.bf16.mxu0 0
        %794 = vmatpush1.bf16.msra.mxu0 0
        %795 = vmatprep.subr.bf16.mxu0 0
        %796 = vmatpush1.bf16.msra.mxu0 0
        %797 = vmatprep.subr.bf16.mxu0 0
        %798 = vmatpush1.bf16.msra.mxu0 %v738
        %799 = vmatprep.subr.bf16.mxu0 0
        %800 = vmatpush2.bf16.msra.mxu0 0
        %801 = vmatprep.subr.bf16.mxu0 0
        %802 = vmatpush2.bf16.msra.mxu0 0
        %803 = vmatprep.subr.bf16.mxu0 0
        %804 = vmatpush2.bf16.msra.mxu0 0
        %805 = vmatprep.subr.bf16.mxu0 0
        %806 = vmatpush2.bf16.msra.mxu0 0
        %807 = vmatprep.subr.bf16.mxu0 0
        %808 = vmatpush2.bf16.msra.mxu0 0
        %809 = vmatprep.subr.bf16.mxu0 0
        %810 = vmatpush2.bf16.msra.mxu0 0
        %811 = vmatprep.subr.bf16.mxu0 0
        %812 = vmatpush2.bf16.msra.mxu0 0
        %813 = vmatprep.subr.bf16.mxu0 0
        %814 = vmatpush2.bf16.msra.mxu0 0
        %815 = vmatprep.mubr.bf16.mxu0 0
        %816 = vmatmul.mubr.bf16.gmra.mxu0 %v729
        %v817 = vpop.f32.mrf.mxu0
        %v818 = vadd.f32 0.0, %v817
        %v819 = vpop.f32.mrf.mxu0
        %v820 = vpop.f32.mrf.mxu0
        %v821 = vadd.f32 0.0, %v820
        %v822 = vpop.f32.mrf.mxu0
        %823 = vdwg.mxu0
        %v824 = vadd.f32 %v702, %v775
        %v825 = vadd.f32 %v703, %v777
        %v826 = vadd.f32 %v704, %v818
        %v827 = vadd.f32 %v705, %v779
        %v828 = vadd.f32 %v706, %v781
        %v829 = vadd.f32 %v707, %v821
        %s830 = scalar_lea.vmem %s0, 32
        %v831 = vld [vmem:[%s830] sm:$0xf]
        %v832 = vld [vmem:[%s830 + $0x4] sm:$0xf]
        %v835 = vunpack.c.l.b16 %v831
        %v836 = vunpack.c.l.b16 %v832
        %v837 = vpack.c.b16 %v836, %v835
        %838 = vrot.lane.b32.xlu0 %v355, 109
        %v839 = vpop.permute.xlu0 %838
        %840 = vrot.lane.b32.xlu0 %v363, 109
        %v841 = vpop.permute.xlu0 %840
        %842 = vrot.lane.b32.xlu0 %v362, 109
        %v843 = vpop.permute.xlu0 %842
        %844 = vrot.lane.b32.xlu0 %v346, 109
        %v845 = vpop.permute.xlu0 %844
        %vm846 = vcmask 891904
        %v847 = vsel %vm846, %v839, %v841
        %v848 = vsel %vm846, %v841, %v843
        %v849 = vsel %vm846, %v843, %v845
        %v851 = vsel %vm387, %v837, 0
        %v854 = vsel %vm391, %v847, 0
        %v857 = vsel %vm391, %v848, 0
        %v860 = vsel %vm391, %v849, 0
        %862 = vmatprep.subr.bf16.mxu0 0
        %863 = vmatpush1.bf16.msra.mxu0 0
        %864 = vmatprep.subr.bf16.mxu0 0
        %865 = vmatpush1.bf16.msra.mxu0 0
        %866 = vmatprep.subr.bf16.mxu0 0
        %867 = vmatpush1.bf16.msra.mxu0 0
        %868 = vmatprep.subr.bf16.mxu0 0
        %869 = vmatpush1.bf16.msra.mxu0 0
        %870 = vmatprep.subr.bf16.mxu0 0
        %871 = vmatpush1.bf16.msra.mxu0 0
        %872 = vmatprep.subr.bf16.mxu0 0
        %873 = vmatpush1.bf16.msra.mxu0 0
        %874 = vmatprep.subr.bf16.mxu0 0
        %875 = vmatpush1.bf16.msra.mxu0 0
        %876 = vmatprep.subr.bf16.mxu0 %v857
        %877 = vmatpush1.bf16.msra.mxu0 %v854
        %878 = vmatprep.subr.bf16.mxu0 0
        %879 = vmatpush2.bf16.msra.mxu0 0
        %880 = vmatprep.subr.bf16.mxu0 0
        %881 = vmatpush2.bf16.msra.mxu0 0
        %882 = vmatprep.subr.bf16.mxu0 0
        %883 = vmatpush2.bf16.msra.mxu0 0
        %884 = vmatprep.subr.bf16.mxu0 0
        %885 = vmatpush2.bf16.msra.mxu0 0
        %886 = vmatprep.subr.bf16.mxu0 0
        %887 = vmatpush2.bf16.msra.mxu0 0
        %888 = vmatprep.subr.bf16.mxu0 0
        %889 = vmatpush2.bf16.msra.mxu0 0
        %890 = vmatprep.subr.bf16.mxu0 0
        %891 = vmatpush2.bf16.msra.mxu0 0
        %892 = vmatprep.subr.bf16.mxu0 0
        %893 = vmatpush2.bf16.msra.mxu0 0
        %894 = vmatprep.mubr.bf16.mxu0 0
        %895 = vmatmul.mubr.bf16.gmra.mxu0 %v851
        %v896 = vpop.f32.mrf.mxu0
        %v897 = vadd.f32 0.0, %v896
        %v898 = vpop.f32.mrf.mxu0
        %v899 = vadd.f32 0.0, %v898
        %v900 = vpop.f32.mrf.mxu0
        %v901 = vadd.f32 0.0, %v900
        %v902 = vpop.f32.mrf.mxu0
        %v903 = vadd.f32 0.0, %v902
        %904 = vdwg.mxu0
        %905 = vmatprep.subr.bf16.mxu0 0
        %906 = vmatpush1.bf16.msra.mxu0 0
        %907 = vmatprep.subr.bf16.mxu0 0
        %908 = vmatpush1.bf16.msra.mxu0 0
        %909 = vmatprep.subr.bf16.mxu0 0
        %910 = vmatpush1.bf16.msra.mxu0 0
        %911 = vmatprep.subr.bf16.mxu0 0
        %912 = vmatpush1.bf16.msra.mxu0 0
        %913 = vmatprep.subr.bf16.mxu0 0
        %914 = vmatpush1.bf16.msra.mxu0 0
        %915 = vmatprep.subr.bf16.mxu0 0
        %916 = vmatpush1.bf16.msra.mxu0 0
        %917 = vmatprep.subr.bf16.mxu0 0
        %918 = vmatpush1.bf16.msra.mxu0 0
        %919 = vmatprep.subr.bf16.mxu0 0
        %920 = vmatpush1.bf16.msra.mxu0 %v860
        %921 = vmatprep.subr.bf16.mxu0 0
        %922 = vmatpush2.bf16.msra.mxu0 0
        %923 = vmatprep.subr.bf16.mxu0 0
        %924 = vmatpush2.bf16.msra.mxu0 0
        %925 = vmatprep.subr.bf16.mxu0 0
        %926 = vmatpush2.bf16.msra.mxu0 0
        %927 = vmatprep.subr.bf16.mxu0 0
        %928 = vmatpush2.bf16.msra.mxu0 0
        %929 = vmatprep.subr.bf16.mxu0 0
        %930 = vmatpush2.bf16.msra.mxu0 0
        %931 = vmatprep.subr.bf16.mxu0 0
        %932 = vmatpush2.bf16.msra.mxu0 0
        %933 = vmatprep.subr.bf16.mxu0 0
        %934 = vmatpush2.bf16.msra.mxu0 0
        %935 = vmatprep.subr.bf16.mxu0 0
        %936 = vmatpush2.bf16.msra.mxu0 0
        %937 = vmatprep.mubr.bf16.mxu0 0
        %938 = vmatmul.mubr.bf16.gmra.mxu0 %v851
        %v939 = vpop.f32.mrf.mxu0
        %v940 = vadd.f32 0.0, %v939
        %v941 = vpop.f32.mrf.mxu0
        %v942 = vpop.f32.mrf.mxu0
        %v943 = vadd.f32 0.0, %v942
        %v944 = vpop.f32.mrf.mxu0
        %945 = vdwg.mxu0
        %v946 = vadd.f32 %v824, %v897
        %v947 = vadd.f32 %v825, %v899
        %v948 = vadd.f32 %v826, %v940
        %v949 = vadd.f32 %v827, %v901
        %v950 = vadd.f32 %v828, %v903
        %v951 = vadd.f32 %v829, %v943
        %s952 = scalar_lea.vmem %s0, 40
        %v953 = vld [vmem:[%s952] sm:$0xf]
        %v954 = vld [vmem:[%s952 + $0x4] sm:$0xf]
        %v957 = vunpack.c.l.b16 %v953
        %v958 = vunpack.c.l.b16 %v954
        %v959 = vpack.c.b16 %v958, %v957
        %960 = vrot.lane.b32.xlu0 %v355, 108
        %v961 = vpop.permute.xlu0 %960
        %962 = vrot.lane.b32.xlu0 %v363, 108
        %v963 = vpop.permute.xlu0 %962
        %964 = vrot.lane.b32.xlu0 %v362, 108
        %v965 = vpop.permute.xlu0 %964
        %966 = vrot.lane.b32.xlu0 %v346, 108
        %v967 = vpop.permute.xlu0 %966
        %vm968 = vcmask 883712
        %v969 = vsel %vm968, %v961, %v963
        %v970 = vsel %vm968, %v963, %v965
        %v971 = vsel %vm968, %v965, %v967
        %v973 = vsel %vm387, %v959, 0
        %v976 = vsel %vm391, %v969, 0
        %v979 = vsel %vm391, %v970, 0
        %v982 = vsel %vm391, %v971, 0
        %984 = vmatprep.subr.bf16.mxu0 0
        %985 = vmatpush1.bf16.msra.mxu0 0
        %986 = vmatprep.subr.bf16.mxu0 0
        %987 = vmatpush1.bf16.msra.mxu0 0
        %988 = vmatprep.subr.bf16.mxu0 0
        %989 = vmatpush1.bf16.msra.mxu0 0
        %990 = vmatprep.subr.bf16.mxu0 0
        %991 = vmatpush1.bf16.msra.mxu0 0
        %992 = vmatprep.subr.bf16.mxu0 0
        %993 = vmatpush1.bf16.msra.mxu0 0
        %994 = vmatprep.subr.bf16.mxu0 0
        %995 = vmatpush1.bf16.msra.mxu0 0
        %996 = vmatprep.subr.bf16.mxu0 0
        %997 = vmatpush1.bf16.msra.mxu0 0
        %998 = vmatprep.subr.bf16.mxu0 %v979
        %999 = vmatpush1.bf16.msra.mxu0 %v976
        %1000 = vmatprep.subr.bf16.mxu0 0
        %1001 = vmatpush2.bf16.msra.mxu0 0
        %1002 = vmatprep.subr.bf16.mxu0 0
        %1003 = vmatpush2.bf16.msra.mxu0 0
        %1004 = vmatprep.subr.bf16.mxu0 0
        %1005 = vmatpush2.bf16.msra.mxu0 0
        %1006 = vmatprep.subr.bf16.mxu0 0
        %1007 = vmatpush2.bf16.msra.mxu0 0
        %1008 = vmatprep.subr.bf16.mxu0 0
        %1009 = vmatpush2.bf16.msra.mxu0 0
        %1010 = vmatprep.subr.bf16.mxu0 0
        %1011 = vmatpush2.bf16.msra.mxu0 0
        %1012 = vmatprep.subr.bf16.mxu0 0
        %1013 = vmatpush2.bf16.msra.mxu0 0
        %1014 = vmatprep.subr.bf16.mxu0 0
        %1015 = vmatpush2.bf16.msra.mxu0 0
        %1016 = vmatprep.mubr.bf16.mxu0 0
        %1017 = vmatmul.mubr.bf16.gmra.mxu0 %v973
        %v1018 = vpop.f32.mrf.mxu0
        %v1019 = vadd.f32 0.0, %v1018
        %v1020 = vpop.f32.mrf.mxu0
        %v1021 = vadd.f32 0.0, %v1020
        %v1022 = vpop.f32.mrf.mxu0
        %v1023 = vadd.f32 0.0, %v1022
        %v1024 = vpop.f32.mrf.mxu0
        %v1025 = vadd.f32 0.0, %v1024
        %1026 = vdwg.mxu0
        %1027 = vmatprep.subr.bf16.mxu0 0
        %1028 = vmatpush1.bf16.msra.mxu0 0
        %1029 = vmatprep.subr.bf16.mxu0 0
        %1030 = vmatpush1.bf16.msra.mxu0 0
        %1031 = vmatprep.subr.bf16.mxu0 0
        %1032 = vmatpush1.bf16.msra.mxu0 0
        %1033 = vmatprep.subr.bf16.mxu0 0
        %1034 = vmatpush1.bf16.msra.mxu0 0
        %1035 = vmatprep.subr.bf16.mxu0 0
        %1036 = vmatpush1.bf16.msra.mxu0 0
        %1037 = vmatprep.subr.bf16.mxu0 0
        %1038 = vmatpush1.bf16.msra.mxu0 0
        %1039 = vmatprep.subr.bf16.mxu0 0
        %1040 = vmatpush1.bf16.msra.mxu0 0
        %1041 = vmatprep.subr.bf16.mxu0 0
        %1042 = vmatpush1.bf16.msra.mxu0 %v982
        %1043 = vmatprep.subr.bf16.mxu0 0
        %1044 = vmatpush2.bf16.msra.mxu0 0
        %1045 = vmatprep.subr.bf16.mxu0 0
        %1046 = vmatpush2.bf16.msra.mxu0 0
        %1047 = vmatprep.subr.bf16.mxu0 0
        %1048 = vmatpush2.bf16.msra.mxu0 0
        %1049 = vmatprep.subr.bf16.mxu0 0
        %1050 = vmatpush2.bf16.msra.mxu0 0
        %1051 = vmatprep.subr.bf16.mxu0 0
        %1052 = vmatpush2.bf16.msra.mxu0 0
        %1053 = vmatprep.subr.bf16.mxu0 0
        %1054 = vmatpush2.bf16.msra.mxu0 0
        %1055 = vmatprep.subr.bf16.mxu0 0
        %1056 = vmatpush2.bf16.msra.mxu0 0
        %1057 = vmatprep.subr.bf16.mxu0 0
        %1058 = vmatpush2.bf16.msra.mxu0 0
        %1059 = vmatprep.mubr.bf16.mxu0 0
        %1060 = vmatmul.mubr.bf16.gmra.mxu0 %v973
        %v1061 = vpop.f32.mrf.mxu0
        %v1062 = vadd.f32 0.0, %v1061
        %v1063 = vpop.f32.mrf.mxu0
        %v1064 = vpop.f32.mrf.mxu0
        %v1065 = vadd.f32 0.0, %v1064
        %v1066 = vpop.f32.mrf.mxu0
        %1067 = vdwg.mxu0
        %v1068 = vadd.f32 %v946, %v1019
        %v1069 = vadd.f32 %v947, %v1021
        %v1070 = vadd.f32 %v948, %v1062
        %v1071 = vadd.f32 %v949, %v1023
        %v1072 = vadd.f32 %v950, %v1025
        %v1073 = vadd.f32 %v951, %v1065
        %s1074 = scalar_lea.vmem %s0, 48
        %v1075 = vld [vmem:[%s1074] sm:$0xf]
        %v1076 = vld [vmem:[%s1074 + $0x4] sm:$0xf]
        %v1079 = vunpack.c.l.b16 %v1075
        %v1080 = vunpack.c.l.b16 %v1076
        %v1081 = vpack.c.b16 %v1080, %v1079
        %1082 = vrot.lane.b32.xlu0 %v355, 92
        %v1083 = vpop.permute.xlu0 %1082
        %1084 = vrot.lane.b32.xlu0 %v363, 92
        %v1085 = vpop.permute.xlu0 %1084
        %1086 = vrot.lane.b32.xlu0 %v362, 92
        %v1087 = vpop.permute.xlu0 %1086
        %1088 = vrot.lane.b32.xlu0 %v346, 92
        %v1089 = vpop.permute.xlu0 %1088
        %vm1090 = vcmask 752640
        %v1091 = vsel %vm1090, %v1083, %v1085
        %v1092 = vsel %vm1090, %v1085, %v1087
        %v1093 = vsel %vm1090, %v1087, %v1089
        %v1095 = vsel %vm387, %v1081, 0
        %v1098 = vsel %vm391, %v1091, 0
        %v1101 = vsel %vm391, %v1092, 0
        %v1104 = vsel %vm391, %v1093, 0
        %1106 = vmatprep.subr.bf16.mxu0 0
        %1107 = vmatpush1.bf16.msra.mxu0 0
        %1108 = vmatprep.subr.bf16.mxu0 0
        %1109 = vmatpush1.bf16.msra.mxu0 0
        %1110 = vmatprep.subr.bf16.mxu0 0
        %1111 = vmatpush1.bf16.msra.mxu0 0
        %1112 = vmatprep.subr.bf16.mxu0 0
        %1113 = vmatpush1.bf16.msra.mxu0 0
        %1114 = vmatprep.subr.bf16.mxu0 0
        %1115 = vmatpush1.bf16.msra.mxu0 0
        %1116 = vmatprep.subr.bf16.mxu0 0
        %1117 = vmatpush1.bf16.msra.mxu0 0
        %1118 = vmatprep.subr.bf16.mxu0 0
        %1119 = vmatpush1.bf16.msra.mxu0 0
        %1120 = vmatprep.subr.bf16.mxu0 %v1101
        %1121 = vmatpush1.bf16.msra.mxu0 %v1098
        %1122 = vmatprep.subr.bf16.mxu0 0
        %1123 = vmatpush2.bf16.msra.mxu0 0
        %1124 = vmatprep.subr.bf16.mxu0 0
        %1125 = vmatpush2.bf16.msra.mxu0 0
        %1126 = vmatprep.subr.bf16.mxu0 0
        %1127 = vmatpush2.bf16.msra.mxu0 0
        %1128 = vmatprep.subr.bf16.mxu0 0
        %1129 = vmatpush2.bf16.msra.mxu0 0
        %1130 = vmatprep.subr.bf16.mxu0 0
        %1131 = vmatpush2.bf16.msra.mxu0 0
        %1132 = vmatprep.subr.bf16.mxu0 0
        %1133 = vmatpush2.bf16.msra.mxu0 0
        %1134 = vmatprep.subr.bf16.mxu0 0
        %1135 = vmatpush2.bf16.msra.mxu0 0
        %1136 = vmatprep.subr.bf16.mxu0 0
        %1137 = vmatpush2.bf16.msra.mxu0 0
        %1138 = vmatprep.mubr.bf16.mxu0 0
        %1139 = vmatmul.mubr.bf16.gmra.mxu0 %v1095
        %v1140 = vpop.f32.mrf.mxu0
        %v1141 = vadd.f32 0.0, %v1140
        %v1142 = vpop.f32.mrf.mxu0
        %v1143 = vadd.f32 0.0, %v1142
        %v1144 = vpop.f32.mrf.mxu0
        %v1145 = vadd.f32 0.0, %v1144
        %v1146 = vpop.f32.mrf.mxu0
        %v1147 = vadd.f32 0.0, %v1146
        %1148 = vdwg.mxu0
        %1149 = vmatprep.subr.bf16.mxu0 0
        %1150 = vmatpush1.bf16.msra.mxu0 0
        %1151 = vmatprep.subr.bf16.mxu0 0
        %1152 = vmatpush1.bf16.msra.mxu0 0
        %1153 = vmatprep.subr.bf16.mxu0 0
        %1154 = vmatpush1.bf16.msra.mxu0 0
        %1155 = vmatprep.subr.bf16.mxu0 0
        %1156 = vmatpush1.bf16.msra.mxu0 0
        %1157 = vmatprep.subr.bf16.mxu0 0
        %1158 = vmatpush1.bf16.msra.mxu0 0
        %1159 = vmatprep.subr.bf16.mxu0 0
        %1160 = vmatpush1.bf16.msra.mxu0 0
        %1161 = vmatprep.subr.bf16.mxu0 0
        %1162 = vmatpush1.bf16.msra.mxu0 0
        %1163 = vmatprep.subr.bf16.mxu0 0
        %1164 = vmatpush1.bf16.msra.mxu0 %v1104
        %1165 = vmatprep.subr.bf16.mxu0 0
        %1166 = vmatpush2.bf16.msra.mxu0 0
        %1167 = vmatprep.subr.bf16.mxu0 0
        %1168 = vmatpush2.bf16.msra.mxu0 0
        %1169 = vmatprep.subr.bf16.mxu0 0
        %1170 = vmatpush2.bf16.msra.mxu0 0
        %1171 = vmatprep.subr.bf16.mxu0 0
        %1172 = vmatpush2.bf16.msra.mxu0 0
        %1173 = vmatprep.subr.bf16.mxu0 0
        %1174 = vmatpush2.bf16.msra.mxu0 0
        %1175 = vmatprep.subr.bf16.mxu0 0
        %1176 = vmatpush2.bf16.msra.mxu0 0
        %1177 = vmatprep.subr.bf16.mxu0 0
        %1178 = vmatpush2.bf16.msra.mxu0 0
        %1179 = vmatprep.subr.bf16.mxu0 0
        %1180 = vmatpush2.bf16.msra.mxu0 0
        %1181 = vmatprep.mubr.bf16.mxu0 0
        %1182 = vmatmul.mubr.bf16.gmra.mxu0 %v1095
        %v1183 = vpop.f32.mrf.mxu0
        %v1184 = vadd.f32 0.0, %v1183
        %v1185 = vpop.f32.mrf.mxu0
        %v1186 = vpop.f32.mrf.mxu0
        %v1187 = vadd.f32 0.0, %v1186
        %v1188 = vpop.f32.mrf.mxu0
        %1189 = vdwg.mxu0
        %v1190 = vadd.f32 %v1068, %v1141
        %v1191 = vadd.f32 %v1069, %v1143
        %v1192 = vadd.f32 %v1070, %v1184
        %v1193 = vadd.f32 %v1071, %v1145
        %v1194 = vadd.f32 %v1072, %v1147
        %v1195 = vadd.f32 %v1073, %v1187
        %s1196 = scalar_lea.vmem %s0, 56
        %v1197 = vld [vmem:[%s1196] sm:$0xf]
        %v1198 = vld [vmem:[%s1196 + $0x4] sm:$0xf]
        %v1201 = vunpack.c.l.b16 %v1197
        %v1202 = vunpack.c.l.b16 %v1198
        %v1203 = vpack.c.b16 %v1202, %v1201
        %1204 = vrot.lane.b32.xlu0 %v355, 91
        %v1205 = vpop.permute.xlu0 %1204
        %1206 = vrot.lane.b32.xlu0 %v363, 91
        %v1207 = vpop.permute.xlu0 %1206
        %1208 = vrot.lane.b32.xlu0 %v362, 91
        %v1209 = vpop.permute.xlu0 %1208
        %1210 = vrot.lane.b32.xlu0 %v346, 91
        %v1211 = vpop.permute.xlu0 %1210
        %vm1212 = vcmask 744448
        %v1213 = vsel %vm1212, %v1205, %v1207
        %v1214 = vsel %vm1212, %v1207, %v1209
        %v1215 = vsel %vm1212, %v1209, %v1211
        %v1217 = vsel %vm387, %v1203, 0
        %v1220 = vsel %vm391, %v1213, 0
        %v1223 = vsel %vm391, %v1214, 0
        %v1226 = vsel %vm391, %v1215, 0
        %1228 = vmatprep.subr.bf16.mxu0 0
        %1229 = vmatpush1.bf16.msra.mxu0 0
        %1230 = vmatprep.subr.bf16.mxu0 0
        %1231 = vmatpush1.bf16.msra.mxu0 0
        %1232 = vmatprep.subr.bf16.mxu0 0
        %1233 = vmatpush1.bf16.msra.mxu0 0
        %1234 = vmatprep.subr.bf16.mxu0 0
        %1235 = vmatpush1.bf16.msra.mxu0 0
        %1236 = vmatprep.subr.bf16.mxu0 0
        %1237 = vmatpush1.bf16.msra.mxu0 0
        %1238 = vmatprep.subr.bf16.mxu0 0
        %1239 = vmatpush1.bf16.msra.mxu0 0
        %1240 = vmatprep.subr.bf16.mxu0 0
        %1241 = vmatpush1.bf16.msra.mxu0 0
        %1242 = vmatprep.subr.bf16.mxu0 %v1223
        %1243 = vmatpush1.bf16.msra.mxu0 %v1220
        %1244 = vmatprep.subr.bf16.mxu0 0
        %1245 = vmatpush2.bf16.msra.mxu0 0
        %1246 = vmatprep.subr.bf16.mxu0 0
        %1247 = vmatpush2.bf16.msra.mxu0 0
        %1248 = vmatprep.subr.bf16.mxu0 0
        %1249 = vmatpush2.bf16.msra.mxu0 0
        %1250 = vmatprep.subr.bf16.mxu0 0
        %1251 = vmatpush2.bf16.msra.mxu0 0
        %1252 = vmatprep.subr.bf16.mxu0 0
        %1253 = vmatpush2.bf16.msra.mxu0 0
        %1254 = vmatprep.subr.bf16.mxu0 0
        %1255 = vmatpush2.bf16.msra.mxu0 0
        %1256 = vmatprep.subr.bf16.mxu0 0
        %1257 = vmatpush2.bf16.msra.mxu0 0
        %1258 = vmatprep.subr.bf16.mxu0 0
        %1259 = vmatpush2.bf16.msra.mxu0 0
        %1260 = vmatprep.mubr.bf16.mxu0 0
        %1261 = vmatmul.mubr.bf16.gmra.mxu0 %v1217
        %v1262 = vpop.f32.mrf.mxu0
        %v1263 = vadd.f32 0.0, %v1262
        %v1264 = vpop.f32.mrf.mxu0
        %v1265 = vadd.f32 0.0, %v1264
        %v1266 = vpop.f32.mrf.mxu0
        %v1267 = vadd.f32 0.0, %v1266
        %v1268 = vpop.f32.mrf.mxu0
        %v1269 = vadd.f32 0.0, %v1268
        %1270 = vdwg.mxu0
        %1271 = vmatprep.subr.bf16.mxu0 0
        %1272 = vmatpush1.bf16.msra.mxu0 0
        %1273 = vmatprep.subr.bf16.mxu0 0
        %1274 = vmatpush1.bf16.msra.mxu0 0
        %1275 = vmatprep.subr.bf16.mxu0 0
        %1276 = vmatpush1.bf16.msra.mxu0 0
        %1277 = vmatprep.subr.bf16.mxu0 0
        %1278 = vmatpush1.bf16.msra.mxu0 0
        %1279 = vmatprep.subr.bf16.mxu0 0
        %1280 = vmatpush1.bf16.msra.mxu0 0
        %1281 = vmatprep.subr.bf16.mxu0 0
        %1282 = vmatpush1.bf16.msra.mxu0 0
        %1283 = vmatprep.subr.bf16.mxu0 0
        %1284 = vmatpush1.bf16.msra.mxu0 0
        %1285 = vmatprep.subr.bf16.mxu0 0
        %1286 = vmatpush1.bf16.msra.mxu0 %v1226
        %1287 = vmatprep.subr.bf16.mxu0 0
        %1288 = vmatpush2.bf16.msra.mxu0 0
        %1289 = vmatprep.subr.bf16.mxu0 0
        %1290 = vmatpush2.bf16.msra.mxu0 0
        %1291 = vmatprep.subr.bf16.mxu0 0
        %1292 = vmatpush2.bf16.msra.mxu0 0
        %1293 = vmatprep.subr.bf16.mxu0 0
        %1294 = vmatpush2.bf16.msra.mxu0 0
        %1295 = vmatprep.subr.bf16.mxu0 0
        %1296 = vmatpush2.bf16.msra.mxu0 0
        %1297 = vmatprep.subr.bf16.mxu0 0
        %1298 = vmatpush2.bf16.msra.mxu0 0
        %1299 = vmatprep.subr.bf16.mxu0 0
        %1300 = vmatpush2.bf16.msra.mxu0 0
        %1301 = vmatprep.subr.bf16.mxu0 0
        %1302 = vmatpush2.bf16.msra.mxu0 0
        %1303 = vmatprep.mubr.bf16.mxu0 0
        %1304 = vmatmul.mubr.bf16.gmra.mxu0 %v1217
        %v1305 = vpop.f32.mrf.mxu0
        %v1306 = vadd.f32 0.0, %v1305
        %v1307 = vpop.f32.mrf.mxu0
        %v1308 = vpop.f32.mrf.mxu0
        %v1309 = vadd.f32 0.0, %v1308
        %v1310 = vpop.f32.mrf.mxu0
        %1311 = vdwg.mxu0
        %v1312 = vadd.f32 %v1190, %v1263
        %v1313 = vadd.f32 %v1191, %v1265
        %v1314 = vadd.f32 %v1192, %v1306
        %v1315 = vadd.f32 %v1193, %v1267
        %v1316 = vadd.f32 %v1194, %v1269
        %v1317 = vadd.f32 %v1195, %v1309
        %s1318 = scalar_lea.vmem %s0, 64
        %v1319 = vld [vmem:[%s1318] sm:$0xf]
        %v1320 = vld [vmem:[%s1318 + $0x4] sm:$0xf]
        %v1323 = vunpack.c.l.b16 %v1319
        %v1324 = vunpack.c.l.b16 %v1320
        %v1325 = vpack.c.b16 %v1324, %v1323
        %1326 = vrot.lane.b32.xlu0 %v355, 90
        %v1327 = vpop.permute.xlu0 %1326
        %1328 = vrot.lane.b32.xlu0 %v363, 90
        %v1329 = vpop.permute.xlu0 %1328
        %1330 = vrot.lane.b32.xlu0 %v362, 90
        %v1331 = vpop.permute.xlu0 %1330
        %1332 = vrot.lane.b32.xlu0 %v346, 90
        %v1333 = vpop.permute.xlu0 %1332
        %vm1334 = vcmask 736256
        %v1335 = vsel %vm1334, %v1327, %v1329
        %v1336 = vsel %vm1334, %v1329, %v1331
        %v1337 = vsel %vm1334, %v1331, %v1333
        %v1339 = vsel %vm387, %v1325, 0
        %v1342 = vsel %vm391, %v1335, 0
        %v1345 = vsel %vm391, %v1336, 0
        %v1348 = vsel %vm391, %v1337, 0
        %1350 = vmatprep.subr.bf16.mxu0 0
        %1351 = vmatpush1.bf16.msra.mxu0 0
        %1352 = vmatprep.subr.bf16.mxu0 0
        %1353 = vmatpush1.bf16.msra.mxu0 0
        %1354 = vmatprep.subr.bf16.mxu0 0
        %1355 = vmatpush1.bf16.msra.mxu0 0
        %1356 = vmatprep.subr.bf16.mxu0 0
        %1357 = vmatpush1.bf16.msra.mxu0 0
        %1358 = vmatprep.subr.bf16.mxu0 0
        %1359 = vmatpush1.bf16.msra.mxu0 0
        %1360 = vmatprep.subr.bf16.mxu0 0
        %1361 = vmatpush1.bf16.msra.mxu0 0
        %1362 = vmatprep.subr.bf16.mxu0 0
        %1363 = vmatpush1.bf16.msra.mxu0 0
        %1364 = vmatprep.subr.bf16.mxu0 %v1345
        %1365 = vmatpush1.bf16.msra.mxu0 %v1342
        %1366 = vmatprep.subr.bf16.mxu0 0
        %1367 = vmatpush2.bf16.msra.mxu0 0
        %1368 = vmatprep.subr.bf16.mxu0 0
        %1369 = vmatpush2.bf16.msra.mxu0 0
        %1370 = vmatprep.subr.bf16.mxu0 0
        %1371 = vmatpush2.bf16.msra.mxu0 0
        %1372 = vmatprep.subr.bf16.mxu0 0
        %1373 = vmatpush2.bf16.msra.mxu0 0
        %1374 = vmatprep.subr.bf16.mxu0 0
        %1375 = vmatpush2.bf16.msra.mxu0 0
        %1376 = vmatprep.subr.bf16.mxu0 0
        %1377 = vmatpush2.bf16.msra.mxu0 0
        %1378 = vmatprep.subr.bf16.mxu0 0
        %1379 = vmatpush2.bf16.msra.mxu0 0
        %1380 = vmatprep.subr.bf16.mxu0 0
        %1381 = vmatpush2.bf16.msra.mxu0 0
        %1382 = vmatprep.mubr.bf16.mxu0 0
        %1383 = vmatmul.mubr.bf16.gmra.mxu0 %v1339
        %v1384 = vpop.f32.mrf.mxu0
        %v1385 = vadd.f32 0.0, %v1384
        %v1386 = vpop.f32.mrf.mxu0
        %v1387 = vadd.f32 0.0, %v1386
        %v1388 = vpop.f32.mrf.mxu0
        %v1389 = vadd.f32 0.0, %v1388
        %v1390 = vpop.f32.mrf.mxu0
        %v1391 = vadd.f32 0.0, %v1390
        %1392 = vdwg.mxu0
        %1393 = vmatprep.subr.bf16.mxu0 0
        %1394 = vmatpush1.bf16.msra.mxu0 0
        %1395 = vmatprep.subr.bf16.mxu0 0
        %1396 = vmatpush1.bf16.msra.mxu0 0
        %1397 = vmatprep.subr.bf16.mxu0 0
        %1398 = vmatpush1.bf16.msra.mxu0 0
        %1399 = vmatprep.subr.bf16.mxu0 0
        %1400 = vmatpush1.bf16.msra.mxu0 0
        %1401 = vmatprep.subr.bf16.mxu0 0
        %1402 = vmatpush1.bf16.msra.mxu0 0
        %1403 = vmatprep.subr.bf16.mxu0 0
        %1404 = vmatpush1.bf16.msra.mxu0 0
        %1405 = vmatprep.subr.bf16.mxu0 0
        %1406 = vmatpush1.bf16.msra.mxu0 0
        %1407 = vmatprep.subr.bf16.mxu0 0
        %1408 = vmatpush1.bf16.msra.mxu0 %v1348
        %1409 = vmatprep.subr.bf16.mxu0 0
        %1410 = vmatpush2.bf16.msra.mxu0 0
        %1411 = vmatprep.subr.bf16.mxu0 0
        %1412 = vmatpush2.bf16.msra.mxu0 0
        %1413 = vmatprep.subr.bf16.mxu0 0
        %1414 = vmatpush2.bf16.msra.mxu0 0
        %1415 = vmatprep.subr.bf16.mxu0 0
        %1416 = vmatpush2.bf16.msra.mxu0 0
        %1417 = vmatprep.subr.bf16.mxu0 0
        %1418 = vmatpush2.bf16.msra.mxu0 0
        %1419 = vmatprep.subr.bf16.mxu0 0
        %1420 = vmatpush2.bf16.msra.mxu0 0
        %1421 = vmatprep.subr.bf16.mxu0 0
        %1422 = vmatpush2.bf16.msra.mxu0 0
        %1423 = vmatprep.subr.bf16.mxu0 0
        %1424 = vmatpush2.bf16.msra.mxu0 0
        %1425 = vmatprep.mubr.bf16.mxu0 0
        %1426 = vmatmul.mubr.bf16.gmra.mxu0 %v1339
        %v1427 = vpop.f32.mrf.mxu0
        %v1428 = vadd.f32 0.0, %v1427
        %v1429 = vpop.f32.mrf.mxu0
        %v1430 = vpop.f32.mrf.mxu0
        %v1431 = vadd.f32 0.0, %v1430
        %v1432 = vpop.f32.mrf.mxu0
        %1433 = vdwg.mxu0
        %v1434 = vadd.f32 %v1312, %v1385
        %v1435 = vadd.f32 %v1313, %v1387
        %v1436 = vadd.f32 %v1314, %v1428
        %v1437 = vadd.f32 %v1315, %v1389
        %v1438 = vadd.f32 %v1316, %v1391
        %v1439 = vadd.f32 %v1317, %v1431
        %v1440 = vpack.c.bf16 %v1437, %v1434
        %v1441 = vpack.c.bf16 %v1438, %v1435
        %v1442 = vpack.c.bf16 %v1439, %v1436
        %v1446 = vunpack.c.l.b16 %v1440
        %v1447 = vunpack.c.l.b16 %v1441
        %v1448 = vunpack.c.l.b16 %v1442
        %v1449 = vunpack.c.h.b16 %v1440
        %v1450 = vunpack.c.h.b16 %v1441
        %v1451 = vunpack.c.h.b16 %v1442
        %v1452 = vpack.c.b16 %v1447, %v1446
        %v1453 = vpack.c.b16 %v1448, %v1448
        %v1454 = vpack.c.b16 %v1450, %v1449
        %v1455 = vpack.c.b16 %v1451, %v1451
        %1460 = vst [vmem:[%s280] sm:$0xff] %v1452
        %1461 = vst [vmem:[%s280 + $0x8] sm:$0xf] %v1453
        %1462 = vst [vmem:[%s280 + $0xc] sm:$0xff] %v1454
        %1463 = vst [vmem:[%s280 + $0x14] sm:$0xf] %v1455
        %s1464 = smul.u32 %s25, 384
        %v1465 = vlaneseq
        %v1466 = vand.u32 %v1465, 127
        %v1467 = vadd.s32 %v1466, 128
        %v1468 = vadd.s32 %v1466, 256
        %v1469 = vstv %s1464
        %v1470 = vadd.s32 %v1469, %v1466
        %v1471 = vadd.s32 %v1469, %v1467
        %v1472 = vadd.s32 %v1469, %v1468
        %vm1473 = vcmp.lt.s32.totalorder %v1470, 288
        %vm1474 = vcmp.lt.s32.totalorder %v1471, 288
        %vm1475 = vcmp.lt.s32.totalorder %v1472, 288
        %vm1476 = vcmp.lt.s32.totalorder %v1470, 0
        %v1477 = vsub.s32 0, %v1470
        %v1478 = vsel %vm1476, %v1477, %v1470
        %v1479 = vmul.u32.u64.compose %v1478, 3817748708
        %v1480 = vextract.low.u32 %v1479
        %v1481 = vextract.high.u32 %v1479
        %v1482 = vshrl.u32 %v1481, 4
        %v1483 = vmul.u32 %v1482, 18
        %v1484 = vsub.s32 %v1478, %v1483
        %v1485 = vsub.s32 0, %v1484
        %v1486 = vsel %vm1476, %v1485, %v1484
        %vm1487 = vcmp.lt.s32.totalorder %v1471, 0
        %v1488 = vsub.s32 0, %v1471
        %v1489 = vsel %vm1487, %v1488, %v1471
        %v1490 = vmul.u32.u64.compose %v1489, 3817748708
        %v1491 = vextract.low.u32 %v1490
        %v1492 = vextract.high.u32 %v1490
        %v1493 = vshrl.u32 %v1492, 4
        %v1494 = vmul.u32 %v1493, 18
        %v1495 = vsub.s32 %v1489, %v1494
        %v1496 = vsub.s32 0, %v1495
        %v1497 = vsel %vm1487, %v1496, %v1495
        %vm1498 = vcmp.lt.s32.totalorder %v1472, 0
        %v1499 = vsub.s32 0, %v1472
        %v1500 = vsel %vm1498, %v1499, %v1472
        %v1501 = vmul.u32.u64.compose %v1500, 3817748708
        %v1502 = vextract.low.u32 %v1501
        %v1503 = vextract.high.u32 %v1501
        %v1504 = vshrl.u32 %v1503, 4
        %v1505 = vmul.u32 %v1504, 18
        %v1506 = vsub.s32 %v1500, %v1505
        %v1507 = vsub.s32 0, %v1506
        %v1508 = vsel %vm1498, %v1507, %v1506
        %vm1509 = vcmp.ne.s32.totalorder %v1486, 0
        %vm1510 = vcmp.ne.s32.totalorder %v1497, 0
        %vm1511 = vcmp.ne.s32.totalorder %v1508, 0
        %vm1512 = vcmp.lt.s32.totalorder %v1486, 0
        %vm1513 = vcmp.lt.s32.totalorder %v1497, 0
        %vm1514 = vcmp.lt.s32.totalorder %v1508, 0
        %vm1515 = vmand %vm1512, %vm1509
        %vm1516 = vmand %vm1513, %vm1510
        %vm1517 = vmand %vm1514, %vm1511
        %v1518 = vadd.s32 %v1486, 18
        %v1519 = vadd.s32 %v1497, 18
        %v1520 = vadd.s32 %v1508, 18
        %v1521 = vsel %vm1515, %v1518, %v1486
        %v1522 = vsel %vm1516, %v1519, %v1497
        %v1523 = vsel %vm1517, %v1520, %v1508
        %vm1524 = vcmp.lt.s32.totalorder %v1521, 16
        %vm1525 = vcmp.lt.s32.totalorder %v1522, 16
        %vm1526 = vcmp.lt.s32.totalorder %v1523, 16
        %vm1527 = vmand %vm1473, %vm1524
        %vm1528 = vmand %vm1474, %vm1525
        %vm1529 = vmand %vm1475, %vm1526
        %v1530 = vsel %vm1527, 1, 0
        %v1531 = vsel %vm1528, 1, 0
        %v1532 = vsel %vm1529, 1, 0
        %vm1533 = vcmp.eq.s32.totalorder %v1530, 1
        %vm1534 = vcmp.eq.s32.totalorder %v1531, 1
        %vm1535 = vcmp.eq.s32.totalorder %v1532, 1
        %v1536 = vsel %vm1533, %v1434, 0.0
        %v1537 = vsel %vm1534, %v1435, 0.0
        %v1538 = vsel %vm1535, %v1436, 0.0
        %v1539 = vsel %vm1533, %v1437, 0.0
        %v1540 = vsel %vm1534, %v1438, 0.0
        %v1541 = vsel %vm1535, %v1439, 0.0
        %v1542 = vadd.f32 %v1536, %v1537
        %v1543 = vadd.f32 %v1542, %v1538
        %1544 = vadd.xlane.f32.xlu0 %v1543
        %v1545 = vpop.xlane.xlu0 %1544
        %v1546 = vadd.f32 %v1539, %v1540
        %v1547 = vadd.f32 %v1546, %v1541
        %1548 = vadd.xlane.f32.xlu0 %v1547
        %v1549 = vpop.xlane.xlu0 %1548
        %vm1550 = vcmask 7168
        %1551 = vst.msk [vmem:[%s334] sm:$0xff] %vm1550, %v1545
        %1552 = vst.msk [vmem:[%s334 + $0x8] sm:$0xff] %vm1550, %v1549
        %v1553 = vmul.f32 %v1536, %v1536
        %v1554 = vmul.f32 %v1537, %v1537
        %v1555 = vmul.f32 %v1538, %v1538
        %v1556 = vmul.f32 %v1539, %v1539
        %v1557 = vmul.f32 %v1540, %v1540
        %v1558 = vmul.f32 %v1541, %v1541
        %v1559 = vadd.f32 %v1553, %v1554
        %v1560 = vadd.f32 %v1559, %v1555
        %1561 = vadd.xlane.f32.xlu0 %v1560
        %v1562 = vpop.xlane.xlu0 %1561
        %v1563 = vadd.f32 %v1556, %v1557
        %v1564 = vadd.f32 %v1563, %v1558
        %1565 = vadd.xlane.f32.xlu0 %v1564
        %v1566 = vpop.xlane.xlu0 %1565
        %1567 = vst.msk [vmem:[%s343] sm:$0xff] %vm1550, %v1562
        %1568 = vst.msk [vmem:[%s343 + $0x8] sm:$0xff] %vm1550, %v1566
        %s1569 = sand.u32 %s123, 1
        %s1570 = scalar_lea.sflag [#allocation3], %s1569
        %s1571 = sand.u32 %s123, 1
        %s1572 = smul.addr %s1571, 24
        %s1573 = scalar_lea.vmem [#allocation2], %s1572
        %p1574 = scmp.lt.s32.totalorder %s24, 1
        %s1575 = scalar_select %p1574, %s24, 1
        %p1576 = scmp.lt.s32.totalorder %s25, 0
        %s1577 = scalar_select %p1576, %s25, 0
        %s1578 = smul.addr %s1577, 2
        %s1579 = smul.addr %s1575, 2
        %s1580 = sadd.s32 %s1578, %s1579
        %s1581 = smul.addr %s1580, 8
        %s1582 = scalar_lea.vmem %s4, %s1581
        %p1583 = scmp.lt.s32.totalorder %s24, 1
        %s1584 = scalar_select %p1583, %s24, 1
        %p1585 = scmp.lt.s32.totalorder %s25, 0
        %s1586 = scalar_select %p1585, %s25, 0
        %s1587 = smul.addr %s1586, 2
        %s1588 = smul.addr %s1584, 2
        %s1589 = sadd.s32 %s1587, %s1588
        %s1590 = smul.addr %s1589, 8
        %s1591 = scalar_lea.vmem %s5, %s1590
        // Predicated region
        $region33: #{tpu_custom_call.1} parent=31 // pred_check
          %p1592 = pneg %p133
        $region34: #{tpu_custom_call.1} parent=31 // pred_check_branch
          %1594 = sbr.rel (%p1592) target = $region36
        $region35: #{tpu_custom_call.1} parent=31 // pred_region
          %s1595 = smul.u32 3, %s25
          %s1597 = ssub.s32 384, 384
          %1598 = vsyncadd %s1570, %s1597
          %s1599 = smul.addr %s24, 6
          %s1600 = sadd.s32 %s1595, %s1599
          %s1601 = smul.addr %s1600, 64
          %s1602 = scalar_lea.hbm %s3, %s1601
          %s1603 = sshll.u32 %s1573, 4
          %s1604 = int_to_ptr.vmem [resolvable:$true] %s1603
          %1609 = dma.vmem_to_hbm [thread:$0]  %s1604, 384, %s1602, %s1570, 192, 192, 12
        $region36: #{tpu_custom_call.1} parent=31 // pred_fallthru
          _
        // Predicated region
        $region37: #{tpu_custom_call.1} parent=31 // pred_check
          %p1610 = pneg %p161
        $region38: #{tpu_custom_call.1} parent=31 // pred_check_branch
          %1612 = sbr.rel (%p1610) target = $region40
        $region39: #{tpu_custom_call.1} parent=31 // pred_region
          _
        $region40: #{tpu_custom_call.1} parent=31 // pred_fallthru
          _
        // Predicated region
        $region41: #{tpu_custom_call.1} parent=31 // pred_check
          %p1613 = pneg %p189
        $region42: #{tpu_custom_call.1} parent=31 // pred_check_branch
          %1615 = sbr.rel (%p1613) target = $region44
        $region43: #{tpu_custom_call.1} parent=31 // pred_region
          _
        $region44: #{tpu_custom_call.1} parent=31 // pred_fallthru
          _
      $region32: #{tpu_custom_call.1} parent=5 // pred_fallthru
        _
      %p1616 = scmp.le.s32.totalorder 2, %s15
      // Predicated region
      $region45: #{tpu_custom_call.1} parent=5 // pred_check
        %p1617 = pneg %p1616
      $region46: #{tpu_custom_call.1} parent=5 // pred_check_branch
        %1619 = sbr.rel (%p1617) target = $region48
      $region47: #{tpu_custom_call.1} parent=5 // pred_region
        %s1620 = ssub.s32 %s15, 2
        // Predicated region
        $region49: #{tpu_custom_call.1} parent=47 // pred_check
          %p1621 = pneg %p139
        $region50: #{tpu_custom_call.1} parent=47 // pred_check_branch
          %1623 = sbr.rel (%p1621) target = $region52
        $region51: #{tpu_custom_call.1} parent=47 // pred_region
          %s1624 = sand.u32 %s124, 1
          %s1625 = scalar_lea.sflag [#allocation3], %s1624
          %s1626 = sand.u32 %s124, 1
          %s1627 = smul.addr %s1626, 24
          %s1628 = scalar_lea.vmem [#allocation2], %s1627
          %1629 = dma.done %s1625, 384
        $region52: #{tpu_custom_call.1} parent=47 // pred_fallthru
          _
        // Predicated region
        $region53: #{tpu_custom_call.1} parent=47 // pred_check
          %p1630 = pneg %p167
        $region54: #{tpu_custom_call.1} parent=47 // pred_check_branch
          %1632 = sbr.rel (%p1630) target = $region56
        $region55: #{tpu_custom_call.1} parent=47 // pred_region
          %p1633 = scmp.lt.s32.totalorder %s26, 1
          %s1634 = scalar_select %p1633, %s26, 1
          %p1635 = scmp.lt.s32.totalorder %s27, 0
          %s1636 = scalar_select %p1635, %s27, 0
          %s1637 = smul.addr %s1636, 2
          %s1638 = smul.addr %s1634, 2
          %s1639 = sadd.s32 %s1637, %s1638
          %s1640 = smul.addr %s1639, 8
          %s1641 = scalar_lea.vmem %s4, %s1640
        $region56: #{tpu_custom_call.1} parent=47 // pred_fallthru
          _
        // Predicated region
        $region57: #{tpu_custom_call.1} parent=47 // pred_check
          %p1642 = pneg %p195
        $region58: #{tpu_custom_call.1} parent=47 // pred_check_branch
          %1644 = sbr.rel (%p1642) target = $region60
        $region59: #{tpu_custom_call.1} parent=47 // pred_region
          %p1645 = scmp.lt.s32.totalorder %s26, 1
          %s1646 = scalar_select %p1645, %s26, 1
          %p1647 = scmp.lt.s32.totalorder %s27, 0
          %s1648 = scalar_select %p1647, %s27, 0
          %s1649 = smul.addr %s1648, 2
          %s1650 = smul.addr %s1646, 2
          %s1651 = sadd.s32 %s1649, %s1650
          %s1652 = smul.addr %s1651, 8
          %s1653 = scalar_lea.vmem %s5, %s1652
        $region60: #{tpu_custom_call.1} parent=47 // pred_fallthru
          _
      $region48: #{tpu_custom_call.1} parent=5 // pred_fallthru
        _
    $region6: #{tpu_custom_call.1} parent=1 // loop_footer
      %s19 = sadd.s32 1, %s15
    $region7: #{tpu_custom_call.1} parent=1 // loop_footer_branch
      %14 = sbr.rel target = $region3
    $region8: #{tpu_custom_call.1} parent=1 // loop_exit
      _
    %1654 = vsyncpa [#allocation3], 1
    %s1655 = scalar_lea.sflag [#allocation3], 1
    %1656 = vsyncpa %s1655, 1

</llo_original>
